<compile_context>
chip_gen: v7x
topology: tpu7x:2x2x1
jax: 0.10.0
libtpu: 0.0.40
codegen_flags: <defaults>
</compile_context>

<pallas_src>
import functools

import jax
import jax.numpy as jnp
from jax import lax
from jax.experimental import pallas as pl
from jax.experimental.pallas import tpu as pltpu

_LN_EPS = 1e-5
_SQRT_2_OVER_PI = 0.7978845608028654
_SQRT_HALF = 0.7071067811865476


def _gelu_tanh(x):
    # tanh-approximation GELU: tanh lowers to the EUP (otherwise-idle VLIW slot).
    # |err| vs exact erf GELU ~5e-4 — inside the test tolerance, not bit-identical.
    return 0.5 * x * (1.0 + jnp.tanh(_SQRT_2_OVER_PI * (x + 0.044715 * (x * x * x))))


def _layernorm(z, gamma, beta):
    mu = jnp.mean(z, axis=-1, keepdims=True)
    zc = z - mu
    var = jnp.mean(zc * zc, axis=-1, keepdims=True)
    return zc * lax.rsqrt(var + _LN_EPS) * gamma + beta


def _trans_block_kernel(x_ref, q_ref,
                        g1_ref, be1_ref,
                        wkv_ref, wproj_ref, bproj_ref,
                        g2_ref, be2_ref,
                        w1_ref, b1_ref, w2_ref, b2_ref,
                        o_ref, *, num_heads, scale):
    """One group of G batch elements per grid step.

    x_ref, q_ref : (G, N, C)   activations (VMEM)
    wkv_ref      : (C, 2C)     kv Linear weight, (in, out) layout
    wproj_ref    : (C, C)      proj weight (in, out)
    w1_ref/w2_ref: (C, H)/(H, C)
    1-D params   : (1, C) or (1, H) rows
    o_ref        : (G, N, C)
    """
    f32 = jnp.float32
    G, N, C = x_ref.shape
    GN = G * N
    D = C // num_heads

    # Fold the batch group into the sublane axis for every dense op.
    x = x_ref[...].astype(f32).reshape(GN, C)
    # Fold the attention scale into q once (C muls/row instead of H*N on the scores).
    q = q_ref[...].astype(f32).reshape(GN, C) * scale

    # ---- LayerNorm 1 + kv = Linear(dim, 2*dim, bias=False) ----
    xn = _layernorm(x, g1_ref[...].astype(f32), be1_ref[...].astype(f32))
    kv = jnp.dot(xn, wkv_ref[...].astype(f32),
                 preferred_element_type=f32)            # (GN, 2C): [k heads | v heads]

    # ---- multi-head cross attention; head-concat folded into the projection ----
    wproj = wproj_ref[...].astype(f32)                  # (C, C), rows = input channels
    acc = jnp.zeros((GN, C), dtype=f32)
    qk_dims = (((2,), (2,)), ((0,), (0,)))              # q_h @ k_h^T, batched over group
    pv_dims = (((2,), (1,)), ((0,), (0,)))              # p   @ v_h , batched over group
    for h in range(num_heads):                          # static unroll, tiny H
        lo = h * D
        q_h = q[:, lo:lo + D].reshape(G, N, D)
        k_h = kv[:, lo:lo + D].reshape(G, N, D)
        v_h = kv[:, C + lo:C + lo + D].reshape(G, N, D)
        s = lax.dot_general(q_h, k_h, qk_dims, preferred_element_type=f32)   # (G, N, N)
        s = s - jnp.max(s, axis=-1, keepdims=True)
        p = jnp.exp(s)
        p = p * pl.reciprocal(jnp.sum(p, axis=-1, keepdims=True), approx=True)
        ho = lax.dot_general(p, v_h, pv_dims, preferred_element_type=f32)    # (G, N, D)
        # concat-free projection: head_h contributes through Wproj rows [lo, lo+D).
        acc = acc + jnp.dot(ho.reshape(GN, D), wproj[lo:lo + D, :],
                            preferred_element_type=f32)

    x1 = x + acc + bproj_ref[...].astype(f32)           # residual 1

    # ---- LayerNorm 2 + MLP + residual 2 ----
    xn2 = _layernorm(x1, g2_ref[...].astype(f32), be2_ref[...].astype(f32))
    hid = jnp.dot(xn2, w1_ref[...].astype(f32),
                  preferred_element_type=f32) + b1_ref[...].astype(f32)
    hid = _gelu_tanh(hid)
    mlp = jnp.dot(hid, w2_ref[...].astype(f32),
                  preferred_element_type=f32) + b2_ref[...].astype(f32)

    o_ref[...] = (x1 + mlp).reshape(G, N, C).astype(o_ref.dtype)


def trans_block_mix_pallas(x, q, params, num_heads, num_groups=None):
    """x, q: (B, N, C). params hold PyTorch-layout weights (out_features, in_features).

    num_groups = number of grid steps; each step handles B // num_groups batch elements
    as one slab.  Default 2 when B is even (both v7x TensorCores busy, minimal steps);
    use num_groups=1 on single-TensorCore chips (v5e/v6e) to fold the whole batch.
    """
    B, N, C = x.shape
    assert C % num_heads == 0
    scale = (C // num_heads) ** (-0.5)
    hidden = params["w_fc1"].shape[0]

    if num_groups is None:
        num_groups = 2 if (B >= 2 and B % 2 == 0) else 1
    assert B % num_groups == 0
    G = B // num_groups

    # One-time, tiny weight re-layouts: (out, in) -> (in, out); 1-D params -> (1, len).
    wkv_t = jnp.transpose(params["w_kv"])       # (C, 2C)
    wproj_t = jnp.transpose(params["w_proj"])   # (C, C)
    w1_t = jnp.transpose(params["w_fc1"])       # (C, H)
    w2_t = jnp.transpose(params["w_fc2"])       # (H, C)
    row = lambda v: v.reshape(1, -1)

    kernel = functools.partial(_trans_block_kernel, num_heads=num_heads, scale=scale)
    const = lambda shape: pl.BlockSpec(shape, lambda i: (0,) * len(shape))

    grid_spec = pltpu.PrefetchScalarGridSpec(
        num_scalar_prefetch=0,
        grid=(num_groups,),
        in_specs=[
            pl.BlockSpec((G, N, C), lambda i: (i, 0, 0)),   # x
            pl.BlockSpec((G, N, C), lambda i: (i, 0, 0)),   # q
            const((1, C)), const((1, C)),                   # LN1 gamma / beta
            const((C, 2 * C)),                              # W_kv^T
            const((C, C)), const((1, C)),                   # W_proj^T, b_proj
            const((1, C)), const((1, C)),                   # LN2 gamma / beta
            const((C, hidden)), const((1, hidden)),         # W_fc1^T, b_fc1
            const((hidden, C)), const((1, C)),              # W_fc2^T, b_fc2
        ],
        out_specs=pl.BlockSpec((G, N, C), lambda i: (i, 0, 0)),
    )

    return pl.pallas_call(
        kernel,
        out_shape=jax.ShapeDtypeStruct((B, N, C), x.dtype),
        grid_spec=grid_spec,
        # No vmem_limit_bytes override: working set is tiny and 64 MiB would be the
        # entire physical VMEM on v7x.
        compiler_params=pltpu.CompilerParams(
            dimension_semantics=("parallel",),
        ),
    )(x, q,
      row(params["g1"]), row(params["b1"]),
      wkv_t, wproj_t, row(params["b_proj"]),
      row(params["g2"]), row(params["b2"]),
      w1_t, row(params["b_fc1"]), w2_t, row(params["b_fc2"]))


def trans_block_mix_ref(x, q, params, num_heads):
    """Pure-JAX reference matching the PyTorch module (eval mode, exact erf GELU)."""
    B, N, C = x.shape
    D = C // num_heads
    scale = D ** (-0.5)
    hp = "highest"

    def ln(z, g, b):
        mu = jnp.mean(z, axis=-1, keepdims=True)
        var = jnp.mean((z - mu) ** 2, axis=-1, keepdims=True)
        return (z - mu) / jnp.sqrt(var + _LN_EPS) * g + b

    xn = ln(x, params["g1"], params["b1"])
    kv = jnp.einsum("bnc,dc->bnd", xn, params["w_kv"], precision=hp)     # (B, N, 2C)
    k, v = kv[..., :C], kv[..., C:]
    qh = q.reshape(B, N, num_heads, D).transpose(0, 2, 1, 3)
    kh = k.reshape(B, N, num_heads, D).transpose(0, 2, 1, 3)
    vh = v.reshape(B, N, num_heads, D).transpose(0, 2, 1, 3)
    attn = jnp.einsum("bhnd,bhmd->bhnm", qh, kh, precision=hp) * scale
    attn = jax.nn.softmax(attn, axis=-1)
    o = jnp.einsum("bhnm,bhmd->bhnd", attn, vh, precision=hp)
    o = o.transpose(0, 2, 1, 3).reshape(B, N, C)
    o = jnp.einsum("bnc,dc->bnd", o, params["w_proj"], precision=hp) + params["b_proj"]
    x1 = x + o
    xn2 = ln(x1, params["g2"], params["b2"])
    h = jnp.einsum("bnc,hc->bnh", xn2, params["w_fc1"], precision=hp) + params["b_fc1"]
    h = 0.5 * h * (1.0 + lax.erf(h * _SQRT_HALF))          # exact GELU (nn.GELU default)
    m = jnp.einsum("bnh,ch->bnc", h, params["w_fc2"], precision=hp) + params["b_fc2"]
    return x1 + m


if __name__ == "__main__":
    key = jax.random.PRNGKey(0)
    ks = jax.random.split(key, 13)

    # Small shapes implied by the module: batch=2, seq=16, dim=32, heads=4, mlp hidden=128.
    B, N, C, num_heads = 2, 16, 32, 4
    hidden = int(C * 4.0)

    x = jax.random.normal(ks[0], (B, N, C), dtype=jnp.float32)
    q = jax.random.normal(ks[1], (B, N, C), dtype=jnp.float32)

    params = {
        "g1": 1.0 + 0.1 * jax.random.normal(ks[2], (C,), dtype=jnp.float32),
        "b1": 0.1 * jax.random.normal(ks[3], (C,), dtype=jnp.float32),
        "w_kv": 0.1 * jax.random.normal(ks[4], (2 * C, C), dtype=jnp.float32),   # qkv_bias=False
        "w_proj": 0.1 * jax.random.normal(ks[5], (C, C), dtype=jnp.float32),
        "b_proj": 0.1 * jax.random.normal(ks[6], (C,), dtype=jnp.float32),
        "g2": 1.0 + 0.1 * jax.random.normal(ks[7], (C,), dtype=jnp.float32),
        "b2": 0.1 * jax.random.normal(ks[8], (C,), dtype=jnp.float32),
        "w_fc1": 0.1 * jax.random.normal(ks[9], (hidden, C), dtype=jnp.float32),
        "b_fc1": 0.1 * jax.random.normal(ks[10], (hidden,), dtype=jnp.float32),
        "w_fc2": 0.1 * jax.random.normal(ks[11], (C, hidden), dtype=jnp.float32),
        "b_fc2": 0.1 * jax.random.normal(ks[12], (C,), dtype=jnp.float32),
    }

    # TODO(synk): Dropout / DropPath are stochastic train-time ops; rates default to 0.0
    # (identity) so they are intentionally omitted from the kernel.

    out = trans_block_mix_pallas(x, q, params, num_heads)
    out = jax.block_until_ready(out)

    ref = trans_block_mix_ref(x, q, params, num_heads)
    assert out.shape == (B, N, C), out.shape
    max_err = float(jnp.max(jnp.abs(out - ref)))
    assert jnp.allclose(out, ref, atol=1e-2, rtol=1e-2), f"mismatch vs reference: {max_err}"

    print("KERNEL_OK")
</pallas_src>

<mosaic_0001>
module attributes {stable_mosaic.version = 11 : i64} {
  func.func @_trans_block_kernel(%arg0: i32, %arg1: memref<1x16x32xf32, #tpu.memory_space<vmem>>, %arg2: memref<1x16x32xf32, #tpu.memory_space<vmem>>, %arg3: memref<1x32xf32, #tpu.memory_space<vmem>>, %arg4: memref<1x32xf32, #tpu.memory_space<vmem>>, %arg5: memref<32x64xf32, #tpu.memory_space<vmem>>, %arg6: memref<32x32xf32, #tpu.memory_space<vmem>>, %arg7: memref<1x32xf32, #tpu.memory_space<vmem>>, %arg8: memref<1x32xf32, #tpu.memory_space<vmem>>, %arg9: memref<1x32xf32, #tpu.memory_space<vmem>>, %arg10: memref<32x128xf32, #tpu.memory_space<vmem>>, %arg11: memref<1x128xf32, #tpu.memory_space<vmem>>, %arg12: memref<128x32xf32, #tpu.memory_space<vmem>>, %arg13: memref<1x32xf32, #tpu.memory_space<vmem>>, %arg14: memref<1x16x32xf32, #tpu.memory_space<vmem>>) attributes {dimension_semantics = [#tpu.dimension_semantics<parallel>], iteration_bounds = array<i64: 2>, scalar_prefetch = 0 : i64, scratch_operands = 0 : i64, tpu.core_type = #tpu.core_type<tc>, window_params = [{transform_indices = @transform_0, window_bounds = array<i64: 1, 16, 32>}, {transform_indices = @transform_1, window_bounds = array<i64: 1, 16, 32>}, {pipeline_mode = #tpu.pipeline_mode<synchronous>, transform_indices = @transform_2, window_bounds = array<i64: 1, 32>}, {pipeline_mode = #tpu.pipeline_mode<synchronous>, transform_indices = @transform_3, window_bounds = array<i64: 1, 32>}, {pipeline_mode = #tpu.pipeline_mode<synchronous>, transform_indices = @transform_4, window_bounds = array<i64: 32, 64>}, {pipeline_mode = #tpu.pipeline_mode<synchronous>, transform_indices = @transform_5, window_bounds = array<i64: 32, 32>}, {pipeline_mode = #tpu.pipeline_mode<synchronous>, transform_indices = @transform_6, window_bounds = array<i64: 1, 32>}, {pipeline_mode = #tpu.pipeline_mode<synchronous>, transform_indices = @transform_7, window_bounds = array<i64: 1, 32>}, {pipeline_mode = #tpu.pipeline_mode<synchronous>, transform_indices = @transform_8, window_bounds = array<i64: 1, 32>}, {pipeline_mode = #tpu.pipeline_mode<synchronous>, transform_indices = @transform_9, window_bounds = array<i64: 32, 128>}, {pipeline_mode = #tpu.pipeline_mode<synchronous>, transform_indices = @transform_10, window_bounds = array<i64: 1, 128>}, {pipeline_mode = #tpu.pipeline_mode<synchronous>, transform_indices = @transform_11, window_bounds = array<i64: 128, 32>}, {pipeline_mode = #tpu.pipeline_mode<synchronous>, transform_indices = @transform_12, window_bounds = array<i64: 1, 32>}, {transform_indices = @transform_13, window_bounds = array<i64: 1, 16, 32>}]} {
    %c0 = arith.constant 0 : index
    %c0_0 = arith.constant 0 : index
    %c0_1 = arith.constant 0 : index
    %0 = vector.load %arg1[%c0, %c0_0, %c0_1] : memref<1x16x32xf32, #tpu.memory_space<vmem>>, vector<1x16x32xf32>
    %1 = vector.shape_cast %0 : vector<1x16x32xf32> to vector<16x32xf32>
    %c0_2 = arith.constant 0 : index
    %c0_3 = arith.constant 0 : index
    %c0_4 = arith.constant 0 : index
    %2 = vector.load %arg2[%c0_2, %c0_3, %c0_4] : memref<1x16x32xf32, #tpu.memory_space<vmem>>, vector<1x16x32xf32>
    %3 = vector.shape_cast %2 : vector<1x16x32xf32> to vector<16x32xf32>
    %cst = arith.constant 0.353553385 : f32
    %4 = vector.broadcast %cst : f32 to vector<16x32xf32>
    %5 = arith.mulf %3, %4 : vector<16x32xf32>
    %c0_5 = arith.constant 0 : index
    %c0_6 = arith.constant 0 : index
    %6 = vector.load %arg3[%c0_5, %c0_6] : memref<1x32xf32, #tpu.memory_space<vmem>>, vector<1x32xf32>
    %c0_7 = arith.constant 0 : index
    %c0_8 = arith.constant 0 : index
    %7 = vector.load %arg4[%c0_7, %c0_8] : memref<1x32xf32, #tpu.memory_space<vmem>>, vector<1x32xf32>
    %cst_9 = arith.constant dense<0.000000e+00> : vector<16xf32>
    %8 = vector.multi_reduction <add>, %1, %cst_9 [1] : vector<16x32xf32> to vector<16xf32>
    %9 = vector.shape_cast %8 : vector<16xf32> to vector<16x1xf32>
    %cst_10 = arith.constant 3.200000e+01 : f32
    %10 = vector.broadcast %cst_10 : f32 to vector<16x1xf32>
    %11 = arith.divf %9, %10 : vector<16x1xf32>
    %12 = vector.broadcast %11 : vector<16x1xf32> to vector<16x32xf32>
    %13 = arith.subf %1, %12 : vector<16x32xf32>
    %14 = arith.mulf %13, %13 : vector<16x32xf32>
    %cst_11 = arith.constant dense<0.000000e+00> : vector<16xf32>
    %15 = vector.multi_reduction <add>, %14, %cst_11 [1] : vector<16x32xf32> to vector<16xf32>
    %16 = vector.shape_cast %15 : vector<16xf32> to vector<16x1xf32>
    %cst_12 = arith.constant 3.200000e+01 : f32
    %17 = vector.broadcast %cst_12 : f32 to vector<16x1xf32>
    %18 = arith.divf %16, %17 : vector<16x1xf32>
    %cst_13 = arith.constant 9.99999974E-6 : f32
    %19 = vector.broadcast %cst_13 : f32 to vector<16x1xf32>
    %20 = arith.addf %18, %19 : vector<16x1xf32>
    %21 = math.rsqrt %20 : vector<16x1xf32>
    %22 = vector.broadcast %21 : vector<16x1xf32> to vector<16x32xf32>
    %23 = arith.mulf %13, %22 : vector<16x32xf32>
    %24 = vector.broadcast %6 : vector<1x32xf32> to vector<16x32xf32>
    %25 = arith.mulf %23, %24 : vector<16x32xf32>
    %26 = vector.broadcast %7 : vector<1x32xf32> to vector<16x32xf32>
    %27 = arith.addf %25, %26 : vector<16x32xf32>
    %c0_14 = arith.constant 0 : index
    %c0_15 = arith.constant 0 : index
    %28 = vector.load %arg5[%c0_14, %c0_15] : memref<32x64xf32, #tpu.memory_space<vmem>>, vector<32x64xf32>
    %cst_16 = arith.constant dense<0.000000e+00> : vector<16x64xf32>
    %29 = tpu.matmul %27, %28, %cst_16 {dimension_numbers = #tpu.dot_dimension_numbers<[1], [0], [0], [1], [0, 0, 1, 1], [], []>} : vector<16x32xf32>, vector<32x64xf32>, vector<16x64xf32> -> vector<16x64xf32>
    %c0_17 = arith.constant 0 : index
    %c0_18 = arith.constant 0 : index
    %30 = vector.load %arg6[%c0_17, %c0_18] : memref<32x32xf32, #tpu.memory_space<vmem>>, vector<32x32xf32>
    %cst_19 = arith.constant 0.000000e+00 : f32
    %31 = vector.broadcast %cst_19 : f32 to vector<16x32xf32>
    %32 = vector.extract_strided_slice %5 {offsets = [0, 0], sizes = [16, 8], strides = [1, 1]} : vector<16x32xf32> to vector<16x8xf32>
    %33 = vector.shape_cast %32 : vector<16x8xf32> to vector<1x16x8xf32>
    %34 = vector.extract_strided_slice %29 {offsets = [0, 0], sizes = [16, 8], strides = [1, 1]} : vector<16x64xf32> to vector<16x8xf32>
    %35 = vector.shape_cast %34 : vector<16x8xf32> to vector<1x16x8xf32>
    %36 = vector.extract_strided_slice %29 {offsets = [0, 32], sizes = [16, 8], strides = [1, 1]} : vector<16x64xf32> to vector<16x8xf32>
    %37 = vector.shape_cast %36 : vector<16x8xf32> to vector<1x16x8xf32>
    %cst_20 = arith.constant dense<0.000000e+00> : vector<1x16x16xf32>
    %38 = tpu.matmul %33, %35, %cst_20 {dimension_numbers = #tpu.dot_dimension_numbers<[2], [2], [1], [1], [0, 0, 0, 1, 1, 1], [0], [0]>} : vector<1x16x8xf32>, vector<1x16x8xf32>, vector<1x16x16xf32> -> vector<1x16x16xf32>
    %cst_21 = arith.constant dense<0xFF800000> : vector<1x16xf32>
    %39 = vector.multi_reduction <maximumf>, %38, %cst_21 [2] : vector<1x16x16xf32> to vector<1x16xf32>
    %40 = vector.shape_cast %39 : vector<1x16xf32> to vector<1x16x1xf32>
    %41 = vector.broadcast %40 : vector<1x16x1xf32> to vector<1x16x16xf32>
    %42 = arith.subf %38, %41 : vector<1x16x16xf32>
    %43 = math.exp %42 : vector<1x16x16xf32>
    %cst_22 = arith.constant dense<0.000000e+00> : vector<1x16xf32>
    %44 = vector.multi_reduction <add>, %43, %cst_22 [2] : vector<1x16x16xf32> to vector<1x16xf32>
    %45 = vector.shape_cast %44 : vector<1x16xf32> to vector<1x16x1xf32>
    %46 = tpu.reciprocal %45 {approx = true} : vector<1x16x1xf32> -> vector<1x16x1xf32>
    %47 = vector.broadcast %46 : vector<1x16x1xf32> to vector<1x16x16xf32>
    %48 = arith.mulf %43, %47 : vector<1x16x16xf32>
    %cst_23 = arith.constant dense<0.000000e+00> : vector<1x16x8xf32>
    %49 = tpu.matmul %48, %37, %cst_23 {dimension_numbers = #tpu.dot_dimension_numbers<[2], [1], [1], [2], [0, 0, 0, 1, 1, 2], [0], [0]>} : vector<1x16x16xf32>, vector<1x16x8xf32>, vector<1x16x8xf32> -> vector<1x16x8xf32>
    %50 = vector.shape_cast %49 : vector<1x16x8xf32> to vector<16x8xf32>
    %51 = vector.extract_strided_slice %30 {offsets = [0, 0], sizes = [8, 32], strides = [1, 1]} : vector<32x32xf32> to vector<8x32xf32>
    %cst_24 = arith.constant dense<0.000000e+00> : vector<16x32xf32>
    %52 = tpu.matmul %50, %51, %cst_24 {dimension_numbers = #tpu.dot_dimension_numbers<[1], [0], [0], [1], [0, 0, 1, 1], [], []>} : vector<16x8xf32>, vector<8x32xf32>, vector<16x32xf32> -> vector<16x32xf32>
    %53 = arith.addf %31, %52 : vector<16x32xf32>
    %54 = vector.extract_strided_slice %5 {offsets = [0, 8], sizes = [16, 8], strides = [1, 1]} : vector<16x32xf32> to vector<16x8xf32>
    %55 = vector.shape_cast %54 : vector<16x8xf32> to vector<1x16x8xf32>
    %56 = vector.extract_strided_slice %29 {offsets = [0, 8], sizes = [16, 8], strides = [1, 1]} : vector<16x64xf32> to vector<16x8xf32>
    %57 = vector.shape_cast %56 : vector<16x8xf32> to vector<1x16x8xf32>
    %58 = vector.extract_strided_slice %29 {offsets = [0, 40], sizes = [16, 8], strides = [1, 1]} : vector<16x64xf32> to vector<16x8xf32>
    %59 = vector.shape_cast %58 : vector<16x8xf32> to vector<1x16x8xf32>
    %cst_25 = arith.constant dense<0.000000e+00> : vector<1x16x16xf32>
    %60 = tpu.matmul %55, %57, %cst_25 {dimension_numbers = #tpu.dot_dimension_numbers<[2], [2], [1], [1], [0, 0, 0, 1, 1, 1], [0], [0]>} : vector<1x16x8xf32>, vector<1x16x8xf32>, vector<1x16x16xf32> -> vector<1x16x16xf32>
    %cst_26 = arith.constant dense<0xFF800000> : vector<1x16xf32>
    %61 = vector.multi_reduction <maximumf>, %60, %cst_26 [2] : vector<1x16x16xf32> to vector<1x16xf32>
    %62 = vector.shape_cast %61 : vector<1x16xf32> to vector<1x16x1xf32>
    %63 = vector.broadcast %62 : vector<1x16x1xf32> to vector<1x16x16xf32>
    %64 = arith.subf %60, %63 : vector<1x16x16xf32>
    %65 = math.exp %64 : vector<1x16x16xf32>
    %cst_27 = arith.constant dense<0.000000e+00> : vector<1x16xf32>
    %66 = vector.multi_reduction <add>, %65, %cst_27 [2] : vector<1x16x16xf32> to vector<1x16xf32>
    %67 = vector.shape_cast %66 : vector<1x16xf32> to vector<1x16x1xf32>
    %68 = tpu.reciprocal %67 {approx = true} : vector<1x16x1xf32> -> vector<1x16x1xf32>
    %69 = vector.broadcast %68 : vector<1x16x1xf32> to vector<1x16x16xf32>
    %70 = arith.mulf %65, %69 : vector<1x16x16xf32>
    %cst_28 = arith.constant dense<0.000000e+00> : vector<1x16x8xf32>
    %71 = tpu.matmul %70, %59, %cst_28 {dimension_numbers = #tpu.dot_dimension_numbers<[2], [1], [1], [2], [0, 0, 0, 1, 1, 2], [0], [0]>} : vector<1x16x16xf32>, vector<1x16x8xf32>, vector<1x16x8xf32> -> vector<1x16x8xf32>
    %72 = vector.shape_cast %71 : vector<1x16x8xf32> to vector<16x8xf32>
    %73 = vector.extract_strided_slice %30 {offsets = [8, 0], sizes = [8, 32], strides = [1, 1]} : vector<32x32xf32> to vector<8x32xf32>
    %cst_29 = arith.constant dense<0.000000e+00> : vector<16x32xf32>
    %74 = tpu.matmul %72, %73, %cst_29 {dimension_numbers = #tpu.dot_dimension_numbers<[1], [0], [0], [1], [0, 0, 1, 1], [], []>} : vector<16x8xf32>, vector<8x32xf32>, vector<16x32xf32> -> vector<16x32xf32>
    %75 = arith.addf %53, %74 : vector<16x32xf32>
    %76 = vector.extract_strided_slice %5 {offsets = [0, 16], sizes = [16, 8], strides = [1, 1]} : vector<16x32xf32> to vector<16x8xf32>
    %77 = vector.shape_cast %76 : vector<16x8xf32> to vector<1x16x8xf32>
    %78 = vector.extract_strided_slice %29 {offsets = [0, 16], sizes = [16, 8], strides = [1, 1]} : vector<16x64xf32> to vector<16x8xf32>
    %79 = vector.shape_cast %78 : vector<16x8xf32> to vector<1x16x8xf32>
    %80 = vector.extract_strided_slice %29 {offsets = [0, 48], sizes = [16, 8], strides = [1, 1]} : vector<16x64xf32> to vector<16x8xf32>
    %81 = vector.shape_cast %80 : vector<16x8xf32> to vector<1x16x8xf32>
    %cst_30 = arith.constant dense<0.000000e+00> : vector<1x16x16xf32>
    %82 = tpu.matmul %77, %79, %cst_30 {dimension_numbers = #tpu.dot_dimension_numbers<[2], [2], [1], [1], [0, 0, 0, 1, 1, 1], [0], [0]>} : vector<1x16x8xf32>, vector<1x16x8xf32>, vector<1x16x16xf32> -> vector<1x16x16xf32>
    %cst_31 = arith.constant dense<0xFF800000> : vector<1x16xf32>
    %83 = vector.multi_reduction <maximumf>, %82, %cst_31 [2] : vector<1x16x16xf32> to vector<1x16xf32>
    %84 = vector.shape_cast %83 : vector<1x16xf32> to vector<1x16x1xf32>
    %85 = vector.broadcast %84 : vector<1x16x1xf32> to vector<1x16x16xf32>
    %86 = arith.subf %82, %85 : vector<1x16x16xf32>
    %87 = math.exp %86 : vector<1x16x16xf32>
    %cst_32 = arith.constant dense<0.000000e+00> : vector<1x16xf32>
    %88 = vector.multi_reduction <add>, %87, %cst_32 [2] : vector<1x16x16xf32> to vector<1x16xf32>
    %89 = vector.shape_cast %88 : vector<1x16xf32> to vector<1x16x1xf32>
    %90 = tpu.reciprocal %89 {approx = true} : vector<1x16x1xf32> -> vector<1x16x1xf32>
    %91 = vector.broadcast %90 : vector<1x16x1xf32> to vector<1x16x16xf32>
    %92 = arith.mulf %87, %91 : vector<1x16x16xf32>
    %cst_33 = arith.constant dense<0.000000e+00> : vector<1x16x8xf32>
    %93 = tpu.matmul %92, %81, %cst_33 {dimension_numbers = #tpu.dot_dimension_numbers<[2], [1], [1], [2], [0, 0, 0, 1, 1, 2], [0], [0]>} : vector<1x16x16xf32>, vector<1x16x8xf32>, vector<1x16x8xf32> -> vector<1x16x8xf32>
    %94 = vector.shape_cast %93 : vector<1x16x8xf32> to vector<16x8xf32>
    %95 = vector.extract_strided_slice %30 {offsets = [16, 0], sizes = [8, 32], strides = [1, 1]} : vector<32x32xf32> to vector<8x32xf32>
    %cst_34 = arith.constant dense<0.000000e+00> : vector<16x32xf32>
    %96 = tpu.matmul %94, %95, %cst_34 {dimension_numbers = #tpu.dot_dimension_numbers<[1], [0], [0], [1], [0, 0, 1, 1], [], []>} : vector<16x8xf32>, vector<8x32xf32>, vector<16x32xf32> -> vector<16x32xf32>
    %97 = arith.addf %75, %96 : vector<16x32xf32>
    %98 = vector.extract_strided_slice %5 {offsets = [0, 24], sizes = [16, 8], strides = [1, 1]} : vector<16x32xf32> to vector<16x8xf32>
    %99 = vector.shape_cast %98 : vector<16x8xf32> to vector<1x16x8xf32>
    %100 = vector.extract_strided_slice %29 {offsets = [0, 24], sizes = [16, 8], strides = [1, 1]} : vector<16x64xf32> to vector<16x8xf32>
    %101 = vector.shape_cast %100 : vector<16x8xf32> to vector<1x16x8xf32>
    %102 = vector.extract_strided_slice %29 {offsets = [0, 56], sizes = [16, 8], strides = [1, 1]} : vector<16x64xf32> to vector<16x8xf32>
    %103 = vector.shape_cast %102 : vector<16x8xf32> to vector<1x16x8xf32>
    %cst_35 = arith.constant dense<0.000000e+00> : vector<1x16x16xf32>
    %104 = tpu.matmul %99, %101, %cst_35 {dimension_numbers = #tpu.dot_dimension_numbers<[2], [2], [1], [1], [0, 0, 0, 1, 1, 1], [0], [0]>} : vector<1x16x8xf32>, vector<1x16x8xf32>, vector<1x16x16xf32> -> vector<1x16x16xf32>
    %cst_36 = arith.constant dense<0xFF800000> : vector<1x16xf32>
    %105 = vector.multi_reduction <maximumf>, %104, %cst_36 [2] : vector<1x16x16xf32> to vector<1x16xf32>
    %106 = vector.shape_cast %105 : vector<1x16xf32> to vector<1x16x1xf32>
    %107 = vector.broadcast %106 : vector<1x16x1xf32> to vector<1x16x16xf32>
    %108 = arith.subf %104, %107 : vector<1x16x16xf32>
    %109 = math.exp %108 : vector<1x16x16xf32>
    %cst_37 = arith.constant dense<0.000000e+00> : vector<1x16xf32>
    %110 = vector.multi_reduction <add>, %109, %cst_37 [2] : vector<1x16x16xf32> to vector<1x16xf32>
    %111 = vector.shape_cast %110 : vector<1x16xf32> to vector<1x16x1xf32>
    %112 = tpu.reciprocal %111 {approx = true} : vector<1x16x1xf32> -> vector<1x16x1xf32>
    %113 = vector.broadcast %112 : vector<1x16x1xf32> to vector<1x16x16xf32>
    %114 = arith.mulf %109, %113 : vector<1x16x16xf32>
    %cst_38 = arith.constant dense<0.000000e+00> : vector<1x16x8xf32>
    %115 = tpu.matmul %114, %103, %cst_38 {dimension_numbers = #tpu.dot_dimension_numbers<[2], [1], [1], [2], [0, 0, 0, 1, 1, 2], [0], [0]>} : vector<1x16x16xf32>, vector<1x16x8xf32>, vector<1x16x8xf32> -> vector<1x16x8xf32>
    %116 = vector.shape_cast %115 : vector<1x16x8xf32> to vector<16x8xf32>
    %117 = vector.extract_strided_slice %30 {offsets = [24, 0], sizes = [8, 32], strides = [1, 1]} : vector<32x32xf32> to vector<8x32xf32>
    %cst_39 = arith.constant dense<0.000000e+00> : vector<16x32xf32>
    %118 = tpu.matmul %116, %117, %cst_39 {dimension_numbers = #tpu.dot_dimension_numbers<[1], [0], [0], [1], [0, 0, 1, 1], [], []>} : vector<16x8xf32>, vector<8x32xf32>, vector<16x32xf32> -> vector<16x32xf32>
    %119 = arith.addf %97, %118 : vector<16x32xf32>
    %120 = arith.addf %1, %119 : vector<16x32xf32>
    %c0_40 = arith.constant 0 : index
    %c0_41 = arith.constant 0 : index
    %121 = vector.load %arg7[%c0_40, %c0_41] : memref<1x32xf32, #tpu.memory_space<vmem>>, vector<1x32xf32>
    %122 = vector.broadcast %121 : vector<1x32xf32> to vector<16x32xf32>
    %123 = arith.addf %120, %122 : vector<16x32xf32>
    %c0_42 = arith.constant 0 : index
    %c0_43 = arith.constant 0 : index
    %124 = vector.load %arg8[%c0_42, %c0_43] : memref<1x32xf32, #tpu.memory_space<vmem>>, vector<1x32xf32>
    %c0_44 = arith.constant 0 : index
    %c0_45 = arith.constant 0 : index
    %125 = vector.load %arg9[%c0_44, %c0_45] : memref<1x32xf32, #tpu.memory_space<vmem>>, vector<1x32xf32>
    %cst_46 = arith.constant dense<0.000000e+00> : vector<16xf32>
    %126 = vector.multi_reduction <add>, %123, %cst_46 [1] : vector<16x32xf32> to vector<16xf32>
    %127 = vector.shape_cast %126 : vector<16xf32> to vector<16x1xf32>
    %cst_47 = arith.constant 3.200000e+01 : f32
    %128 = vector.broadcast %cst_47 : f32 to vector<16x1xf32>
    %129 = arith.divf %127, %128 : vector<16x1xf32>
    %130 = vector.broadcast %129 : vector<16x1xf32> to vector<16x32xf32>
    %131 = arith.subf %123, %130 : vector<16x32xf32>
    %132 = arith.mulf %131, %131 : vector<16x32xf32>
    %cst_48 = arith.constant dense<0.000000e+00> : vector<16xf32>
    %133 = vector.multi_reduction <add>, %132, %cst_48 [1] : vector<16x32xf32> to vector<16xf32>
    %134 = vector.shape_cast %133 : vector<16xf32> to vector<16x1xf32>
    %cst_49 = arith.constant 3.200000e+01 : f32
    %135 = vector.broadcast %cst_49 : f32 to vector<16x1xf32>
    %136 = arith.divf %134, %135 : vector<16x1xf32>
    %cst_50 = arith.constant 9.99999974E-6 : f32
    %137 = vector.broadcast %cst_50 : f32 to vector<16x1xf32>
    %138 = arith.addf %136, %137 : vector<16x1xf32>
    %139 = math.rsqrt %138 : vector<16x1xf32>
    %140 = vector.broadcast %139 : vector<16x1xf32> to vector<16x32xf32>
    %141 = arith.mulf %131, %140 : vector<16x32xf32>
    %142 = vector.broadcast %124 : vector<1x32xf32> to vector<16x32xf32>
    %143 = arith.mulf %141, %142 : vector<16x32xf32>
    %144 = vector.broadcast %125 : vector<1x32xf32> to vector<16x32xf32>
    %145 = arith.addf %143, %144 : vector<16x32xf32>
    %c0_51 = arith.constant 0 : index
    %c0_52 = arith.constant 0 : index
    %146 = vector.load %arg10[%c0_51, %c0_52] : memref<32x128xf32, #tpu.memory_space<vmem>>, vector<32x128xf32>
    %cst_53 = arith.constant dense<0.000000e+00> : vector<16x128xf32>
    %147 = tpu.matmul %145, %146, %cst_53 {dimension_numbers = #tpu.dot_dimension_numbers<[1], [0], [0], [1], [0, 0, 1, 1], [], []>} : vector<16x32xf32>, vector<32x128xf32>, vector<16x128xf32> -> vector<16x128xf32>
    %c0_54 = arith.constant 0 : index
    %c0_55 = arith.constant 0 : index
    %148 = vector.load %arg11[%c0_54, %c0_55] : memref<1x128xf32, #tpu.memory_space<vmem>>, vector<1x128xf32>
    %149 = vector.broadcast %148 : vector<1x128xf32> to vector<16x128xf32>
    %150 = arith.addf %147, %149 : vector<16x128xf32>
    %cst_56 = arith.constant 5.000000e-01 : f32
    %151 = vector.broadcast %cst_56 : f32 to vector<16x128xf32>
    %152 = arith.mulf %151, %150 : vector<16x128xf32>
    %153 = arith.mulf %150, %150 : vector<16x128xf32>
    %154 = arith.mulf %153, %150 : vector<16x128xf32>
    %cst_57 = arith.constant 4.471500e-02 : f32
    %155 = vector.broadcast %cst_57 : f32 to vector<16x128xf32>
    %156 = arith.mulf %155, %154 : vector<16x128xf32>
    %157 = arith.addf %150, %156 : vector<16x128xf32>
    %cst_58 = arith.constant 0.797884583 : f32
    %158 = vector.broadcast %cst_58 : f32 to vector<16x128xf32>
    %159 = arith.mulf %158, %157 : vector<16x128xf32>
    %160 = math.tanh %159 : vector<16x128xf32>
    %cst_59 = arith.constant 1.000000e+00 : f32
    %161 = vector.broadcast %cst_59 : f32 to vector<16x128xf32>
    %162 = arith.addf %161, %160 : vector<16x128xf32>
    %163 = arith.mulf %152, %162 : vector<16x128xf32>
    %c0_60 = arith.constant 0 : index
    %c0_61 = arith.constant 0 : index
    %164 = vector.load %arg12[%c0_60, %c0_61] : memref<128x32xf32, #tpu.memory_space<vmem>>, vector<128x32xf32>
    %cst_62 = arith.constant dense<0.000000e+00> : vector<16x32xf32>
    %165 = tpu.matmul %163, %164, %cst_62 {dimension_numbers = #tpu.dot_dimension_numbers<[1], [0], [0], [1], [0, 0, 1, 1], [], []>} : vector<16x128xf32>, vector<128x32xf32>, vector<16x32xf32> -> vector<16x32xf32>
    %c0_63 = arith.constant 0 : index
    %c0_64 = arith.constant 0 : index
    %166 = vector.load %arg13[%c0_63, %c0_64] : memref<1x32xf32, #tpu.memory_space<vmem>>, vector<1x32xf32>
    %167 = vector.broadcast %166 : vector<1x32xf32> to vector<16x32xf32>
    %168 = arith.addf %165, %167 : vector<16x32xf32>
    %169 = arith.addf %123, %168 : vector<16x32xf32>
    %170 = vector.shape_cast %169 : vector<16x32xf32> to vector<1x16x32xf32>
    %c0_65 = arith.constant 0 : index
    %c0_66 = arith.constant 0 : index
    %c0_67 = arith.constant 0 : index
    %171 = vector.load %arg14[%c0_65, %c0_66, %c0_67] : memref<1x16x32xf32, #tpu.memory_space<vmem>>, vector<1x16x32xf32>
    tpu.vector_store %arg14[%c0_65, %c0_66, %c0_67], %170 {strides = array<i32>} : memref<1x16x32xf32, #tpu.memory_space<vmem>>, vector<1x16x32xf32>,
    return
  }
  func.func @transform_0(%arg0: i32) -> (i32, i32, i32) {
    %c0_i32 = arith.constant 0 : i32
    %c0_i32_0 = arith.constant 0 : i32
    %c0_i32_1 = arith.constant 0 : i32
    return %arg0, %c0_i32, %c0_i32_0 : i32, i32, i32
  }
  func.func @transform_1(%arg0: i32) -> (i32, i32, i32) {
    %c0_i32 = arith.constant 0 : i32
    %c0_i32_0 = arith.constant 0 : i32
    %c0_i32_1 = arith.constant 0 : i32
    return %arg0, %c0_i32, %c0_i32_0 : i32, i32, i32
  }
  func.func @transform_2(%arg0: i32) -> (i32, i32) {
    %c0_i32 = arith.constant 0 : i32
    %c0_i32_0 = arith.constant 0 : i32
    %c0_i32_1 = arith.constant 0 : i32
    return %c0_i32, %c0_i32_0 : i32, i32
  }
  func.func @transform_3(%arg0: i32) -> (i32, i32) {
    %c0_i32 = arith.constant 0 : i32
    %c0_i32_0 = arith.constant 0 : i32
    %c0_i32_1 = arith.constant 0 : i32
    return %c0_i32, %c0_i32_0 : i32, i32
  }
  func.func @transform_4(%arg0: i32) -> (i32, i32) {
    %c0_i32 = arith.constant 0 : i32
    %c0_i32_0 = arith.constant 0 : i32
    %c0_i32_1 = arith.constant 0 : i32
    return %c0_i32, %c0_i32_0 : i32, i32
  }
  func.func @transform_5(%arg0: i32) -> (i32, i32) {
    %c0_i32 = arith.constant 0 : i32
    %c0_i32_0 = arith.constant 0 : i32
    %c0_i32_1 = arith.constant 0 : i32
    return %c0_i32, %c0_i32_0 : i32, i32
  }
  func.func @transform_6(%arg0: i32) -> (i32, i32) {
    %c0_i32 = arith.constant 0 : i32
    %c0_i32_0 = arith.constant 0 : i32
    %c0_i32_1 = arith.constant 0 : i32
    return %c0_i32, %c0_i32_0 : i32, i32
  }
  func.func @transform_7(%arg0: i32) -> (i32, i32) {
    %c0_i32 = arith.constant 0 : i32
    %c0_i32_0 = arith.constant 0 : i32
    %c0_i32_1 = arith.constant 0 : i32
    return %c0_i32, %c0_i32_0 : i32, i32
  }
  func.func @transform_8(%arg0: i32) -> (i32, i32) {
    %c0_i32 = arith.constant 0 : i32
    %c0_i32_0 = arith.constant 0 : i32
    %c0_i32_1 = arith.constant 0 : i32
    return %c0_i32, %c0_i32_0 : i32, i32
  }
  func.func @transform_9(%arg0: i32) -> (i32, i32) {
    %c0_i32 = arith.constant 0 : i32
    %c0_i32_0 = arith.constant 0 : i32
    %c0_i32_1 = arith.constant 0 : i32
    return %c0_i32, %c0_i32_0 : i32, i32
  }
  func.func @transform_10(%arg0: i32) -> (i32, i32) {
    %c0_i32 = arith.constant 0 : i32
    %c0_i32_0 = arith.constant 0 : i32
    %c0_i32_1 = arith.constant 0 : i32
    return %c0_i32, %c0_i32_0 : i32, i32
  }
  func.func @transform_11(%arg0: i32) -> (i32, i32) {
    %c0_i32 = arith.constant 0 : i32
    %c0_i32_0 = arith.constant 0 : i32
    %c0_i32_1 = arith.constant 0 : i32
    return %c0_i32, %c0_i32_0 : i32, i32
  }
  func.func @transform_12(%arg0: i32) -> (i32, i32) {
    %c0_i32 = arith.constant 0 : i32
    %c0_i32_0 = arith.constant 0 : i32
    %c0_i32_1 = arith.constant 0 : i32
    return %c0_i32, %c0_i32_0 : i32, i32
  }
  func.func @transform_13(%arg0: i32) -> (i32, i32, i32) {
    %c0_i32 = arith.constant 0 : i32
    %c0_i32_0 = arith.constant 0 : i32
    %c0_i32_1 = arith.constant 0 : i32
    return %arg0, %c0_i32, %c0_i32_0 : i32, i32, i32
  }
}

</mosaic_0001>

<llo_original>
// kernel: tpu_custom_call.1
$region0: #{tpu_custom_call.1}
  #allocation0 [shape = 'u32[]', space=smem, size = 0x4, offset = 0x4, fixed_abs, tag = 'smem constant byte address 0x4 - core index']
  #allocation1 [shape = 'u32[144,128]{1,0:T(1,128)}', space=vmem, size = 0x12000, scoped, tag = 'internal scratch']
  %s0 = inlined_call_operand.vmem [shape: f32[2,16,32], index: 0, kind: input, shape index: {}]
  %s1 = inlined_call_operand.vmem [shape: f32[2,16,32], index: 1, kind: input, shape index: {}]
  %s2 = inlined_call_operand.vmem [shape: f32[1,32], index: 2, kind: input, shape index: {}]
  %s3 = inlined_call_operand.vmem [shape: f32[1,32], index: 3, kind: input, shape index: {}]
  %s4 = inlined_call_operand.vmem [shape: f32[32,64], index: 4, kind: input, shape index: {}]
  %s5 = inlined_call_operand.vmem [shape: f32[32,32], index: 5, kind: input, shape index: {}]
  %s6 = inlined_call_operand.vmem [shape: f32[1,32], index: 6, kind: input, shape index: {}]
  %s7 = inlined_call_operand.vmem [shape: f32[1,32], index: 7, kind: input, shape index: {}]
  %s8 = inlined_call_operand.vmem [shape: f32[1,32], index: 8, kind: input, shape index: {}]
  %s9 = inlined_call_operand.vmem [shape: f32[32,128], index: 9, kind: input, shape index: {}]
  %s10 = inlined_call_operand.vmem [shape: f32[1,128], index: 10, kind: input, shape index: {}]
  %s11 = inlined_call_operand.vmem [shape: f32[128,32], index: 11, kind: input, shape index: {}]
  %s12 = inlined_call_operand.vmem [shape: f32[1,32], index: 12, kind: input, shape index: {}]
  %s13 = inlined_call_operand.hbm [shape: f32[2,16,32], index: 13, kind: output, shape index: {}]
  %s14 = sld [smem:[#allocation0]]
  $region85: #{tpu_custom_call.1} parent=0
    _
  %s16 = ssub.s32 1, %s14
  %s17 = scalar_select 0, %s16, %s14
  $region1: #{tpu_custom_call.1} parent=0
    #allocation2 [shape = 'u8[16384]{0}', space=vmem, size = 0x4000, scoped, tag = 'output window, operand 0']
    #allocation3 [shape = 's32[2]{0}', space=sflag, size = 0x8, scoped, tag = 'scoped memory for tpu_custom_call.1']
    %18 = vsyncpa [#allocation3], 0
    %s19 = scalar_lea.sflag [#allocation3], 1
    %20 = vsyncpa %s19, 0
    loop: start=0, step=1, limit=4
    $region2: #{tpu_custom_call.1} parent=1 // loop_pre_header
      _
    $region3: #{tpu_custom_call.1} parent=1 // loop_header
      %s22 = sphi 0, %s26
      %p23 = scmp.ge.s32.totalorder %s22, 4
      %s32 = sphi 0, %s34
      %s35 = sphi 0, %s32
      %s36 = sphi 0, %s35
      %s52 = sphi 0, %s36
      %s58 = sphi 0, %s60
      %s61 = sphi 0, %s58
      %s62 = sphi 0, %s61
      %s78 = sphi 0, %s62
      %s82 = sphi 0, %s82
      %s84 = sphi 0, %s82
      %s85 = sphi 0, %s84
      %s99 = sphi 0, %s85
      %s103 = sphi 0, %s103
      %s105 = sphi 0, %s103
      %s106 = sphi 0, %s105
      %s120 = sphi 0, %s106
      %s124 = sphi 0, %s124
      %s126 = sphi 0, %s124
      %s127 = sphi 0, %s126
      %s141 = sphi 0, %s127
      %s145 = sphi 0, %s145
      %s147 = sphi 0, %s145
      %s148 = sphi 0, %s147
      %s162 = sphi 0, %s148
      %s166 = sphi 0, %s166
      %s168 = sphi 0, %s166
      %s169 = sphi 0, %s168
      %s183 = sphi 0, %s169
      %s187 = sphi 0, %s187
      %s189 = sphi 0, %s187
      %s190 = sphi 0, %s189
      %s204 = sphi 0, %s190
      %s208 = sphi 0, %s208
      %s210 = sphi 0, %s208
      %s211 = sphi 0, %s210
      %s225 = sphi 0, %s211
      %s229 = sphi 0, %s229
      %s231 = sphi 0, %s229
      %s232 = sphi 0, %s231
      %s246 = sphi 0, %s232
      %s250 = sphi 0, %s250
      %s252 = sphi 0, %s250
      %s253 = sphi 0, %s252
      %s267 = sphi 0, %s253
      %s271 = sphi 0, %s271
      %s273 = sphi 0, %s271
      %s274 = sphi 0, %s273
      %s288 = sphi 0, %s274
      %s292 = sphi 0, %s292
      %s294 = sphi 0, %s292
      %s295 = sphi 0, %s294
      %s309 = sphi 0, %s295
      %s315 = sphi 0, %s317
      %s318 = sphi 0, %s315
      %s319 = sphi 0, %s318
      %s335 = sphi 0, %s319
    $region4: #{tpu_custom_call.1} parent=1 // loop_header_branch
      %25 = sbr.rel (%p23) target = $region8
    $region5: #{tpu_custom_call.1} parent=1 // loop_body
      %s27 = ssub.s32 %s22, 1
      %s28 = ssub.s32 %s22, 2
      %s29 = sadd.s32 %s22, 1
      %s30 = ssub.s32 %s22, %s29
      %p31 = scmp.eq.s32.totalorder %s30, 0
      %s33 = sadd.s32 %s32, 1
      %s34 = scalar_select %p31, %s32, %s33
      %p37 = pneg %p31
      %p38 = scmp.eq.s32.totalorder %s22, 1
      %p39 = por %p37, %p38
      %p40 = scmp.ne.s32.totalorder %s32, %s35
      %p41 = scmp.eq.s32.totalorder %s22, 0
      %p42 = por %p40, %p41
      %p43 = scmp.ne.s32.totalorder %s32, %s35
      %p44 = scmp.eq.s32.totalorder %s27, 1
      %p45 = por %p43, %p44
      %p46 = scmp.ne.s32.totalorder %s35, %s36
      %p47 = scmp.eq.s32.totalorder %s27, 0
      %p48 = por %p46, %p47
      %p49 = scmp.ne.s32.totalorder %s35, %s36
      %p50 = scmp.eq.s32.totalorder %s28, 1
      %p51 = por %p49, %p50
      %p53 = scmp.ne.s32.totalorder %s36, %s52
      %p54 = scmp.eq.s32.totalorder %s28, 0
      %p55 = por %p53, %p54
      %s56 = ssub.s32 %s22, %s29
      %p57 = scmp.eq.s32.totalorder %s56, 0
      %s59 = sadd.s32 %s58, 1
      %s60 = scalar_select %p57, %s58, %s59
      %p63 = pneg %p57
      %p64 = scmp.eq.s32.totalorder %s22, 1
      %p65 = por %p63, %p64
      %p66 = scmp.ne.s32.totalorder %s58, %s61
      %p67 = scmp.eq.s32.totalorder %s22, 0
      %p68 = por %p66, %p67
      %p69 = scmp.ne.s32.totalorder %s58, %s61
      %p70 = scmp.eq.s32.totalorder %s27, 1
      %p71 = por %p69, %p70
      %p72 = scmp.ne.s32.totalorder %s61, %s62
      %p73 = scmp.eq.s32.totalorder %s27, 0
      %p74 = por %p72, %p73
      %p75 = scmp.ne.s32.totalorder %s61, %s62
      %p76 = scmp.eq.s32.totalorder %s28, 1
      %p77 = por %p75, %p76
      %p79 = scmp.ne.s32.totalorder %s62, %s78
      %p80 = scmp.eq.s32.totalorder %s28, 0
      %p81 = por %p79, %p80
      %s83 = sadd.s32 %s82, 1
      %p86 = scmp.eq.s32.totalorder %s22, 1
      %p87 = scmp.ne.s32.totalorder %s82, %s84
      %p88 = scmp.eq.s32.totalorder %s22, 0
      %p89 = por %p87, %p88
      %p90 = scmp.ne.s32.totalorder %s82, %s84
      %p91 = scmp.eq.s32.totalorder %s27, 1
      %p92 = por %p90, %p91
      %p93 = scmp.ne.s32.totalorder %s84, %s85
      %p94 = scmp.eq.s32.totalorder %s27, 0
      %p95 = por %p93, %p94
      %p96 = scmp.ne.s32.totalorder %s84, %s85
      %p97 = scmp.eq.s32.totalorder %s28, 1
      %p98 = por %p96, %p97
      %p100 = scmp.ne.s32.totalorder %s85, %s99
      %p101 = scmp.eq.s32.totalorder %s28, 0
      %p102 = por %p100, %p101
      %s104 = sadd.s32 %s103, 1
      %p107 = scmp.eq.s32.totalorder %s22, 1
      %p108 = scmp.ne.s32.totalorder %s103, %s105
      %p109 = scmp.eq.s32.totalorder %s22, 0
      %p110 = por %p108, %p109
      %p111 = scmp.ne.s32.totalorder %s103, %s105
      %p112 = scmp.eq.s32.totalorder %s27, 1
      %p113 = por %p111, %p112
      %p114 = scmp.ne.s32.totalorder %s105, %s106
      %p115 = scmp.eq.s32.totalorder %s27, 0
      %p116 = por %p114, %p115
      %p117 = scmp.ne.s32.totalorder %s105, %s106
      %p118 = scmp.eq.s32.totalorder %s28, 1
      %p119 = por %p117, %p118
      %p121 = scmp.ne.s32.totalorder %s106, %s120
      %p122 = scmp.eq.s32.totalorder %s28, 0
      %p123 = por %p121, %p122
      %s125 = sadd.s32 %s124, 1
      %p128 = scmp.eq.s32.totalorder %s22, 1
      %p129 = scmp.ne.s32.totalorder %s124, %s126
      %p130 = scmp.eq.s32.totalorder %s22, 0
      %p131 = por %p129, %p130
      %p132 = scmp.ne.s32.totalorder %s124, %s126
      %p133 = scmp.eq.s32.totalorder %s27, 1
      %p134 = por %p132, %p133
      %p135 = scmp.ne.s32.totalorder %s126, %s127
      %p136 = scmp.eq.s32.totalorder %s27, 0
      %p137 = por %p135, %p136
      %p138 = scmp.ne.s32.totalorder %s126, %s127
      %p139 = scmp.eq.s32.totalorder %s28, 1
      %p140 = por %p138, %p139
      %p142 = scmp.ne.s32.totalorder %s127, %s141
      %p143 = scmp.eq.s32.totalorder %s28, 0
      %p144 = por %p142, %p143
      %s146 = sadd.s32 %s145, 1
      %p149 = scmp.eq.s32.totalorder %s22, 1
      %p150 = scmp.ne.s32.totalorder %s145, %s147
      %p151 = scmp.eq.s32.totalorder %s22, 0
      %p152 = por %p150, %p151
      %p153 = scmp.ne.s32.totalorder %s145, %s147
      %p154 = scmp.eq.s32.totalorder %s27, 1
      %p155 = por %p153, %p154
      %p156 = scmp.ne.s32.totalorder %s147, %s148
      %p157 = scmp.eq.s32.totalorder %s27, 0
      %p158 = por %p156, %p157
      %p159 = scmp.ne.s32.totalorder %s147, %s148
      %p160 = scmp.eq.s32.totalorder %s28, 1
      %p161 = por %p159, %p160
      %p163 = scmp.ne.s32.totalorder %s148, %s162
      %p164 = scmp.eq.s32.totalorder %s28, 0
      %p165 = por %p163, %p164
      %s167 = sadd.s32 %s166, 1
      %p170 = scmp.eq.s32.totalorder %s22, 1
      %p171 = scmp.ne.s32.totalorder %s166, %s168
      %p172 = scmp.eq.s32.totalorder %s22, 0
      %p173 = por %p171, %p172
      %p174 = scmp.ne.s32.totalorder %s166, %s168
      %p175 = scmp.eq.s32.totalorder %s27, 1
      %p176 = por %p174, %p175
      %p177 = scmp.ne.s32.totalorder %s168, %s169
      %p178 = scmp.eq.s32.totalorder %s27, 0
      %p179 = por %p177, %p178
      %p180 = scmp.ne.s32.totalorder %s168, %s169
      %p181 = scmp.eq.s32.totalorder %s28, 1
      %p182 = por %p180, %p181
      %p184 = scmp.ne.s32.totalorder %s169, %s183
      %p185 = scmp.eq.s32.totalorder %s28, 0
      %p186 = por %p184, %p185
      %s188 = sadd.s32 %s187, 1
      %p191 = scmp.eq.s32.totalorder %s22, 1
      %p192 = scmp.ne.s32.totalorder %s187, %s189
      %p193 = scmp.eq.s32.totalorder %s22, 0
      %p194 = por %p192, %p193
      %p195 = scmp.ne.s32.totalorder %s187, %s189
      %p196 = scmp.eq.s32.totalorder %s27, 1
      %p197 = por %p195, %p196
      %p198 = scmp.ne.s32.totalorder %s189, %s190
      %p199 = scmp.eq.s32.totalorder %s27, 0
      %p200 = por %p198, %p199
      %p201 = scmp.ne.s32.totalorder %s189, %s190
      %p202 = scmp.eq.s32.totalorder %s28, 1
      %p203 = por %p201, %p202
      %p205 = scmp.ne.s32.totalorder %s190, %s204
      %p206 = scmp.eq.s32.totalorder %s28, 0
      %p207 = por %p205, %p206
      %s209 = sadd.s32 %s208, 1
      %p212 = scmp.eq.s32.totalorder %s22, 1
      %p213 = scmp.ne.s32.totalorder %s208, %s210
      %p214 = scmp.eq.s32.totalorder %s22, 0
      %p215 = por %p213, %p214
      %p216 = scmp.ne.s32.totalorder %s208, %s210
      %p217 = scmp.eq.s32.totalorder %s27, 1
      %p218 = por %p216, %p217
      %p219 = scmp.ne.s32.totalorder %s210, %s211
      %p220 = scmp.eq.s32.totalorder %s27, 0
      %p221 = por %p219, %p220
      %p222 = scmp.ne.s32.totalorder %s210, %s211
      %p223 = scmp.eq.s32.totalorder %s28, 1
      %p224 = por %p222, %p223
      %p226 = scmp.ne.s32.totalorder %s211, %s225
      %p227 = scmp.eq.s32.totalorder %s28, 0
      %p228 = por %p226, %p227
      %s230 = sadd.s32 %s229, 1
      %p233 = scmp.eq.s32.totalorder %s22, 1
      %p234 = scmp.ne.s32.totalorder %s229, %s231
      %p235 = scmp.eq.s32.totalorder %s22, 0
      %p236 = por %p234, %p235
      %p237 = scmp.ne.s32.totalorder %s229, %s231
      %p238 = scmp.eq.s32.totalorder %s27, 1
      %p239 = por %p237, %p238
      %p240 = scmp.ne.s32.totalorder %s231, %s232
      %p241 = scmp.eq.s32.totalorder %s27, 0
      %p242 = por %p240, %p241
      %p243 = scmp.ne.s32.totalorder %s231, %s232
      %p244 = scmp.eq.s32.totalorder %s28, 1
      %p245 = por %p243, %p244
      %p247 = scmp.ne.s32.totalorder %s232, %s246
      %p248 = scmp.eq.s32.totalorder %s28, 0
      %p249 = por %p247, %p248
      %s251 = sadd.s32 %s250, 1
      %p254 = scmp.eq.s32.totalorder %s22, 1
      %p255 = scmp.ne.s32.totalorder %s250, %s252
      %p256 = scmp.eq.s32.totalorder %s22, 0
      %p257 = por %p255, %p256
      %p258 = scmp.ne.s32.totalorder %s250, %s252
      %p259 = scmp.eq.s32.totalorder %s27, 1
      %p260 = por %p258, %p259
      %p261 = scmp.ne.s32.totalorder %s252, %s253
      %p262 = scmp.eq.s32.totalorder %s27, 0
      %p263 = por %p261, %p262
      %p264 = scmp.ne.s32.totalorder %s252, %s253
      %p265 = scmp.eq.s32.totalorder %s28, 1
      %p266 = por %p264, %p265
      %p268 = scmp.ne.s32.totalorder %s253, %s267
      %p269 = scmp.eq.s32.totalorder %s28, 0
      %p270 = por %p268, %p269
      %s272 = sadd.s32 %s271, 1
      %p275 = scmp.eq.s32.totalorder %s22, 1
      %p276 = scmp.ne.s32.totalorder %s271, %s273
      %p277 = scmp.eq.s32.totalorder %s22, 0
      %p278 = por %p276, %p277
      %p279 = scmp.ne.s32.totalorder %s271, %s273
      %p280 = scmp.eq.s32.totalorder %s27, 1
      %p281 = por %p279, %p280
      %p282 = scmp.ne.s32.totalorder %s273, %s274
      %p283 = scmp.eq.s32.totalorder %s27, 0
      %p284 = por %p282, %p283
      %p285 = scmp.ne.s32.totalorder %s273, %s274
      %p286 = scmp.eq.s32.totalorder %s28, 1
      %p287 = por %p285, %p286
      %p289 = scmp.ne.s32.totalorder %s274, %s288
      %p290 = scmp.eq.s32.totalorder %s28, 0
      %p291 = por %p289, %p290
      %s293 = sadd.s32 %s292, 1
      %p296 = scmp.eq.s32.totalorder %s22, 1
      %p297 = scmp.ne.s32.totalorder %s292, %s294
      %p298 = scmp.eq.s32.totalorder %s22, 0
      %p299 = por %p297, %p298
      %p300 = scmp.ne.s32.totalorder %s292, %s294
      %p301 = scmp.eq.s32.totalorder %s27, 1
      %p302 = por %p300, %p301
      %p303 = scmp.ne.s32.totalorder %s294, %s295
      %p304 = scmp.eq.s32.totalorder %s27, 0
      %p305 = por %p303, %p304
      %p306 = scmp.ne.s32.totalorder %s294, %s295
      %p307 = scmp.eq.s32.totalorder %s28, 1
      %p308 = por %p306, %p307
      %p310 = scmp.ne.s32.totalorder %s295, %s309
      %p311 = scmp.eq.s32.totalorder %s28, 0
      %p312 = por %p310, %p311
      %s313 = ssub.s32 %s22, %s29
      %p314 = scmp.eq.s32.totalorder %s313, 0
      %s316 = sadd.s32 %s315, 1
      %s317 = scalar_select %p314, %s315, %s316
      %p320 = pneg %p314
      %p321 = scmp.eq.s32.totalorder %s22, 1
      %p322 = por %p320, %p321
      %p323 = scmp.ne.s32.totalorder %s315, %s318
      %p324 = scmp.eq.s32.totalorder %s22, 0
      %p325 = por %p323, %p324
      %p326 = scmp.ne.s32.totalorder %s315, %s318
      %p327 = scmp.eq.s32.totalorder %s27, 1
      %p328 = por %p326, %p327
      %p329 = scmp.ne.s32.totalorder %s318, %s319
      %p330 = scmp.eq.s32.totalorder %s27, 0
      %p331 = por %p329, %p330
      %p332 = scmp.ne.s32.totalorder %s318, %s319
      %p333 = scmp.eq.s32.totalorder %s28, 1
      %p334 = por %p332, %p333
      %p336 = scmp.ne.s32.totalorder %s319, %s335
      %p337 = scmp.eq.s32.totalorder %s28, 0
      %p338 = por %p336, %p337
      %p339 = scmp.le.s32.totalorder 1, %s22
      %p340 = scmp.lt.s32.totalorder %s22, 3
      %p341 = pnand %p339, %p340
      %p342 = pneg %p341
      // Predicated region
      $region9: #{tpu_custom_call.1} parent=5 // pred_check
        _
      $region10: #{tpu_custom_call.1} parent=5 // pred_check_branch
        %344 = sbr.rel (%p341) target = $region12
      $region11: #{tpu_custom_call.1} parent=5 // pred_region
        %s345 = ssub.s32 %s22, 1
        // Predicated region
        $region13: #{tpu_custom_call.1} parent=11 // pred_check
          %p346 = pneg %p95
        $region14: #{tpu_custom_call.1} parent=11 // pred_check_branch
          %348 = sbr.rel (%p346) target = $region16
        $region15: #{tpu_custom_call.1} parent=11 // pred_region
          _
        $region16: #{tpu_custom_call.1} parent=11 // pred_fallthru
          _
        // Predicated region
        $region17: #{tpu_custom_call.1} parent=11 // pred_check
          %p349 = pneg %p116
        $region18: #{tpu_custom_call.1} parent=11 // pred_check_branch
          %351 = sbr.rel (%p349) target = $region20
        $region19: #{tpu_custom_call.1} parent=11 // pred_region
          _
        $region20: #{tpu_custom_call.1} parent=11 // pred_fallthru
          _
        // Predicated region
        $region21: #{tpu_custom_call.1} parent=11 // pred_check
          %p352 = pneg %p137
        $region22: #{tpu_custom_call.1} parent=11 // pred_check_branch
          %354 = sbr.rel (%p352) target = $region24
        $region23: #{tpu_custom_call.1} parent=11 // pred_region
          _
        $region24: #{tpu_custom_call.1} parent=11 // pred_fallthru
          _
        // Predicated region
        $region25: #{tpu_custom_call.1} parent=11 // pred_check
          %p355 = pneg %p158
        $region26: #{tpu_custom_call.1} parent=11 // pred_check_branch
          %357 = sbr.rel (%p355) target = $region28
        $region27: #{tpu_custom_call.1} parent=11 // pred_region
          _
        $region28: #{tpu_custom_call.1} parent=11 // pred_fallthru
          _
        // Predicated region
        $region29: #{tpu_custom_call.1} parent=11 // pred_check
          %p358 = pneg %p179
        $region30: #{tpu_custom_call.1} parent=11 // pred_check_branch
          %360 = sbr.rel (%p358) target = $region32
        $region31: #{tpu_custom_call.1} parent=11 // pred_region
          _
        $region32: #{tpu_custom_call.1} parent=11 // pred_fallthru
          _
        // Predicated region
        $region33: #{tpu_custom_call.1} parent=11 // pred_check
          %p361 = pneg %p200
        $region34: #{tpu_custom_call.1} parent=11 // pred_check_branch
          %363 = sbr.rel (%p361) target = $region36
        $region35: #{tpu_custom_call.1} parent=11 // pred_region
          _
        $region36: #{tpu_custom_call.1} parent=11 // pred_fallthru
          _
        // Predicated region
        $region37: #{tpu_custom_call.1} parent=11 // pred_check
          %p364 = pneg %p221
        $region38: #{tpu_custom_call.1} parent=11 // pred_check_branch
          %366 = sbr.rel (%p364) target = $region40
        $region39: #{tpu_custom_call.1} parent=11 // pred_region
          _
        $region40: #{tpu_custom_call.1} parent=11 // pred_fallthru
          _
        // Predicated region
        $region41: #{tpu_custom_call.1} parent=11 // pred_check
          %p367 = pneg %p242
        $region42: #{tpu_custom_call.1} parent=11 // pred_check_branch
          %369 = sbr.rel (%p367) target = $region44
        $region43: #{tpu_custom_call.1} parent=11 // pred_region
          _
        $region44: #{tpu_custom_call.1} parent=11 // pred_fallthru
          _
        // Predicated region
        $region45: #{tpu_custom_call.1} parent=11 // pred_check
          %p370 = pneg %p263
        $region46: #{tpu_custom_call.1} parent=11 // pred_check_branch
          %372 = sbr.rel (%p370) target = $region48
        $region47: #{tpu_custom_call.1} parent=11 // pred_region
          _
        $region48: #{tpu_custom_call.1} parent=11 // pred_fallthru
          _
        // Predicated region
        $region49: #{tpu_custom_call.1} parent=11 // pred_check
          %p373 = pneg %p284
        $region50: #{tpu_custom_call.1} parent=11 // pred_check_branch
          %375 = sbr.rel (%p373) target = $region52
        $region51: #{tpu_custom_call.1} parent=11 // pred_region
          _
        $region52: #{tpu_custom_call.1} parent=11 // pred_fallthru
          _
        // Predicated region
        $region53: #{tpu_custom_call.1} parent=11 // pred_check
          %p376 = pneg %p305
        $region54: #{tpu_custom_call.1} parent=11 // pred_check_branch
          %378 = sbr.rel (%p376) target = $region56
        $region55: #{tpu_custom_call.1} parent=11 // pred_region
          _
        $region56: #{tpu_custom_call.1} parent=11 // pred_fallthru
          _
      $region12: #{tpu_custom_call.1} parent=5 // pred_fallthru
        _
      %p379 = scmp.lt.s32.totalorder %s22, 2
      // Predicated region
      $region57: #{tpu_custom_call.1} parent=5 // pred_check
        %p380 = pneg %p379
      $region58: #{tpu_custom_call.1} parent=5 // pred_check_branch
        %382 = sbr.rel (%p380) target = $region60
      $region59: #{tpu_custom_call.1} parent=5 // pred_region
        // Predicated region
        $region61: #{tpu_custom_call.1} parent=59 // pred_check
          %p383 = pneg %p42
        $region62: #{tpu_custom_call.1} parent=59 // pred_check_branch
          %385 = sbr.rel (%p383) target = $region64
        $region63: #{tpu_custom_call.1} parent=59 // pred_region
          %p386 = scmp.lt.s32.totalorder %s22, 1
          %s387 = scalar_select %p386, %s22, 1
          %s388 = smul.addr %s387, 2
          %s389 = smul.addr %s388, 8
          %s390 = scalar_lea.vmem %s0, %s389
        $region64: #{tpu_custom_call.1} parent=59 // pred_fallthru
          _
        // Predicated region
        $region65: #{tpu_custom_call.1} parent=59 // pred_check
          %p391 = pneg %p68
        $region66: #{tpu_custom_call.1} parent=59 // pred_check_branch
          %393 = sbr.rel (%p391) target = $region68
        $region67: #{tpu_custom_call.1} parent=59 // pred_region
          %p394 = scmp.lt.s32.totalorder %s22, 1
          %s395 = scalar_select %p394, %s22, 1
          %s396 = smul.addr %s395, 2
          %s397 = smul.addr %s396, 8
          %s398 = scalar_lea.vmem %s1, %s397
        $region68: #{tpu_custom_call.1} parent=59 // pred_fallthru
          _
      $region60: #{tpu_custom_call.1} parent=5 // pred_fallthru
        _
      %p399 = scmp.le.s32.totalorder 1, %s22
      %p400 = scmp.lt.s32.totalorder %s22, 3
      %p401 = pnand %p399, %p400
      %p402 = pneg %p401
      // Predicated region
      $region69: #{tpu_custom_call.1} parent=5 // pred_check
        _
      $region70: #{tpu_custom_call.1} parent=5 // pred_check_branch
        %404 = sbr.rel (%p401) target = $region72
      $region71: #{tpu_custom_call.1} parent=5 // pred_region
        %s405 = ssub.s32 %s22, 1
        %p406 = scmp.lt.s32.totalorder %s27, 1
        %s407 = scalar_select %p406, %s27, 1
        %s408 = smul.addr %s407, 2
        %s409 = smul.addr %s408, 8
        %s410 = scalar_lea.vmem %s0, %s409
        %p411 = pneg %p48
        %p412 = pneg %p45
        %p413 = scmp.lt.s32.totalorder %s27, 1
        %s414 = scalar_select %p413, %s27, 1
        %s415 = smul.addr %s414, 2
        %s416 = smul.addr %s415, 8
        %s417 = scalar_lea.vmem %s1, %s416
        %p418 = pneg %p74
        %p419 = pneg %p71
        %p420 = pneg %p95
        %p421 = pneg %p92
        %p422 = pneg %p116
        %p423 = pneg %p113
        %p424 = pneg %p137
        %p425 = pneg %p134
        %p426 = pneg %p158
        %p427 = pneg %p155
        %p428 = pneg %p179
        %p429 = pneg %p176
        %p430 = pneg %p200
        %p431 = pneg %p197
        %p432 = pneg %p221
        %p433 = pneg %p218
        %p434 = pneg %p242
        %p435 = pneg %p239
        %p436 = pneg %p263
        %p437 = pneg %p260
        %p438 = pneg %p284
        %p439 = pneg %p281
        %p440 = pneg %p305
        %p441 = pneg %p302
        %p442 = pneg %p331
        %p443 = pneg %p328
        %s444 = sand.u32 %s318, 1
        %s445 = scalar_lea.sflag [#allocation3], %s444
        %s446 = sand.u32 %s318, 1
        %s447 = smul.addr %s446, 16
        %s448 = scalar_lea.vmem [#allocation2], %s447
        %p449 = scmp.lt.s32.totalorder %s27, 1
        %s450 = scalar_select %p449, %s27, 1
        %s451 = smul.addr %s450, 2
        %s452 = smul.addr %s451, 8
        %s453 = scalar_lea.vmem %s0, %s452
        %p454 = scmp.lt.s32.totalorder %s27, 1
        %s455 = scalar_select %p454, %s27, 1
        %s456 = smul.addr %s455, 2
        %s457 = smul.addr %s456, 8
        %s458 = scalar_lea.vmem %s1, %s457
        %v459 = vld [vmem:[%s453] sm:$0xff]
        %v460 = vld [vmem:[%s453 + $0x8] sm:$0xff]
        %v461 = vld [vmem:[%s458] sm:$0xff]
        %v462 = vld [vmem:[%s458 + $0x8] sm:$0xff]
        %v463 = vmul.f32 %v461, 0.35355338
        %v464 = vmul.f32 %v462, 0.35355338
        %v465 = vld [vmem:[%s2] sm:$0x1]
        %v466 = vld [vmem:[%s3] sm:$0x1]
        %vm467 = vcmask 261120
        %v468 = vsel %vm467, %v459, 0.0
        %469 = vadd.xlane.f32.xlu0 %v468
        %v470 = vpop.xlane.xlu0 %469
        %v471 = vsel %vm467, %v460, 0.0
        %472 = vadd.xlane.f32.xlu0 %v471
        %v473 = vpop.xlane.xlu0 %472
        %v474 = vrcp.pop 32.0
        %v475 = vmul.f32 %v470, %v474
        %v476 = vmul.f32 %v473, %v474
        %v477 = vsub.f32 %v459, %v475
        %v478 = vsub.f32 %v460, %v476
        %v479 = vmul.f32 %v477, %v477
        %v480 = vmul.f32 %v478, %v478
        %v481 = vsel %vm467, %v479, 0.0
        %482 = vadd.xlane.f32.xlu0 %v481
        %v483 = vpop.xlane.xlu0 %482
        %v484 = vsel %vm467, %v480, 0.0
        %485 = vadd.xlane.f32.xlu0 %v484
        %v486 = vpop.xlane.xlu0 %485
        %v487 = vmul.f32 %v483, %v474
        %v488 = vmul.f32 %v486, %v474
        %v489 = vadd.f32 %v487, 1e-05
        %v490 = vadd.f32 %v488, 1e-05
        %v491 = vrsqrt.pop %v489
        %v492 = vrsqrt.pop %v490
        %v493 = vmul.f32 %v477, %v491
        %v494 = vmul.f32 %v478, %v492
        %v496 = vlaneseq
        %v497 = vshrl.u32 %v496, 7
        %v498 = vsub.s32 0, %v497
        %v499 = vrot.slane %v465, %v498
        %v501 = vmul.f32 %v493, %v499
        %v502 = vmul.f32 %v494, %v499
        %v504 = vlaneseq
        %v505 = vshrl.u32 %v504, 7
        %v506 = vsub.s32 0, %v505
        %v507 = vrot.slane %v466, %v506
        %v509 = vadd.f32 %v501, %v507
        %v510 = vadd.f32 %v502, %v507
        %v511 = vld [vmem:[%s4] sm:$0xff]
        %v512 = vld [vmem:[%s4 + $0x8] sm:$0xff]
        %v513 = vld [vmem:[%s4 + $0x10] sm:$0xff]
        %v514 = vld [vmem:[%s4 + $0x18] sm:$0xff]
        %v516 = vsel %vm467, %v509, 0
        %v519 = vsel %vm467, %v510, 0
        %521 = vmatprep.subr.mxu0 0.0
        %522 = vmatpush1.msra.mxu0 %v511
        %523 = vmatprep.subr.mxu0 0.0
        %524 = vmatpush1.msra.mxu0 %v512
        %525 = vmatprep.subr.mxu0 0.0
        %526 = vmatpush1.msra.mxu0 %v513
        %527 = vmatprep.subr.mxu0 0.0
        %528 = vmatpush1.msra.mxu0 %v514
        %529 = vmatprep.subr.mxu0 0.0
        %530 = vmatpush1.msra.mxu0 0.0
        %531 = vmatprep.subr.mxu0 0.0
        %532 = vmatpush1.msra.mxu0 0.0
        %533 = vmatprep.subr.mxu0 0.0
        %534 = vmatpush1.msra.mxu0 0.0
        %535 = vmatprep.subr.mxu0 0.0
        %536 = vmatpush1.msra.mxu0 0.0
        %537 = vmatprep.subr.mxu0 0.0
        %538 = vmatpush1.msra.mxu0 0.0
        %539 = vmatprep.subr.mxu0 0.0
        %540 = vmatpush1.msra.mxu0 0.0
        %541 = vmatprep.subr.mxu0 0.0
        %542 = vmatpush1.msra.mxu0 0.0
        %543 = vmatprep.subr.mxu0 0.0
        %544 = vmatpush1.msra.mxu0 0.0
        %545 = vmatprep.subr.mxu0 0.0
        %546 = vmatpush1.msra.mxu0 0.0
        %547 = vmatprep.subr.mxu0 0.0
        %548 = vmatpush1.msra.mxu0 0.0
        %549 = vmatprep.subr.mxu0 0.0
        %550 = vmatpush1.msra.mxu0 0.0
        %551 = vmatprep.subr.mxu0 0.0
        %552 = vmatpush1.msra.mxu0 0.0
        %553 = vmatprep.subr.mxu0 0.0
        %554 = vmatpush1.msra.mxu0 0.0
        %555 = vmatprep.subr.mxu0 0.0
        %556 = vmatpush1.msra.mxu0 0.0
        %557 = vmatprep.subr.mxu0 0.0
        %558 = vmatpush1.msra.mxu0 0.0
        %559 = vmatprep.subr.mxu0 0.0
        %560 = vmatpush1.msra.mxu0 0.0
        %561 = vmatprep.subr.mxu0 0.0
        %562 = vmatpush1.msra.mxu0 0.0
        %563 = vmatprep.subr.mxu0 0.0
        %564 = vmatpush1.msra.mxu0 0.0
        %565 = vmatprep.subr.mxu0 0.0
        %566 = vmatpush1.msra.mxu0 0.0
        %567 = vmatprep.subr.mxu0 0.0
        %568 = vmatpush1.msra.mxu0 0.0
        %569 = vmatprep.subr.mxu0 0.0
        %570 = vmatpush1.msra.mxu0 0.0
        %571 = vmatprep.subr.mxu0 0.0
        %572 = vmatpush1.msra.mxu0 0.0
        %573 = vmatprep.subr.mxu0 0.0
        %574 = vmatpush1.msra.mxu0 0.0
        %575 = vmatprep.subr.mxu0 0.0
        %576 = vmatpush1.msra.mxu0 0.0
        %577 = vmatprep.subr.mxu0 0.0
        %578 = vmatpush1.msra.mxu0 0.0
        %579 = vmatprep.subr.mxu0 0.0
        %580 = vmatpush1.msra.mxu0 0.0
        %581 = vmatprep.subr.mxu0 0.0
        %582 = vmatpush1.msra.mxu0 0.0
        %583 = vmatprep.subr.mxu0 0.0
        %584 = vmatpush1.msra.mxu0 0.0
        %585 = vmatprep.mubr.f32.mxu0 0.0
        %586 = vmatmul.mubr.f32.gmra.mrb[0].mxu0 %v516
        %v587 = vpop.f32.mrb[0].mxu0
        %v588 = vadd.f32 0.0, %v587
        %v589 = vpop.f32.mrb[0].mxu0
        %590 = vmatprep.mubr.f32.mxu0 0.0
        %591 = vmatmul.mubr.f32.gmra.mrb[0].mxu0 %v519
        %v592 = vpop.f32.mrb[0].mxu0
        %v593 = vadd.f32 0.0, %v592
        %v594 = vpop.f32.mrb[0].mxu0
        %595 = vdwg.mxu0
        %v596 = vld [vmem:[%s5] sm:$0xff]
        %v597 = vld [vmem:[%s5 + $0x8] sm:$0xff]
        %v598 = vld [vmem:[%s5 + $0x10] sm:$0xff]
        %v599 = vld [vmem:[%s5 + $0x18] sm:$0xff]
        %vm600 = vcmask 64512
        %v602 = vsel %vm600, %v463, 0
        %v605 = vsel %vm600, %v464, 0
        %v608 = vsel %vm600, %v588, 0
        %v611 = vsel %vm600, %v593, 0
        %613 = vmatprep.subr.mxu0 0.0
        %614 = vmatpush1.xpose.msra.mxu0 %v608
        %615 = vmatprep.subr.mxu0 0.0
        %616 = vmatpush1.xpose.msra.mxu0 %v611
        %617 = vmatprep.subr.mxu0 0.0
        %618 = vmatpush1.xpose.msra.mxu0 0.0
        %619 = vmatprep.subr.mxu0 0.0
        %620 = vmatpush1.xpose.msra.mxu0 0.0
        %621 = vmatprep.subr.mxu0 0.0
        %622 = vmatpush1.xpose.msra.mxu0 0.0
        %623 = vmatprep.subr.mxu0 0.0
        %624 = vmatpush1.xpose.msra.mxu0 0.0
        %625 = vmatprep.subr.mxu0 0.0
        %626 = vmatpush1.xpose.msra.mxu0 0.0
        %627 = vmatprep.subr.mxu0 0.0
        %628 = vmatpush1.xpose.msra.mxu0 0.0
        %629 = vmatprep.subr.mxu0 0.0
        %630 = vmatpush1.xpose.msra.mxu0 0.0
        %631 = vmatprep.subr.mxu0 0.0
        %632 = vmatpush1.xpose.msra.mxu0 0.0
        %633 = vmatprep.subr.mxu0 0.0
        %634 = vmatpush1.xpose.msra.mxu0 0.0
        %635 = vmatprep.subr.mxu0 0.0
        %636 = vmatpush1.xpose.msra.mxu0 0.0
        %637 = vmatprep.subr.mxu0 0.0
        %638 = vmatpush1.xpose.msra.mxu0 0.0
        %639 = vmatprep.subr.mxu0 0.0
        %640 = vmatpush1.xpose.msra.mxu0 0.0
        %641 = vmatprep.subr.mxu0 0.0
        %642 = vmatpush1.xpose.msra.mxu0 0.0
        %643 = vmatprep.subr.mxu0 0.0
        %644 = vmatpush1.xpose.msra.mxu0 0.0
        %645 = vmatprep.subr.mxu0 0.0
        %646 = vmatpush1.xpose.msra.mxu0 0.0
        %647 = vmatprep.subr.mxu0 0.0
        %648 = vmatpush1.xpose.msra.mxu0 0.0
        %649 = vmatprep.subr.mxu0 0.0
        %650 = vmatpush1.xpose.msra.mxu0 0.0
        %651 = vmatprep.subr.mxu0 0.0
        %652 = vmatpush1.xpose.msra.mxu0 0.0
        %653 = vmatprep.subr.mxu0 0.0
        %654 = vmatpush1.xpose.msra.mxu0 0.0
        %655 = vmatprep.subr.mxu0 0.0
        %656 = vmatpush1.xpose.msra.mxu0 0.0
        %657 = vmatprep.subr.mxu0 0.0
        %658 = vmatpush1.xpose.msra.mxu0 0.0
        %659 = vmatprep.subr.mxu0 0.0
        %660 = vmatpush1.xpose.msra.mxu0 0.0
        %661 = vmatprep.subr.mxu0 0.0
        %662 = vmatpush1.xpose.msra.mxu0 0.0
        %663 = vmatprep.subr.mxu0 0.0
        %664 = vmatpush1.xpose.msra.mxu0 0.0
        %665 = vmatprep.subr.mxu0 0.0
        %666 = vmatpush1.xpose.msra.mxu0 0.0
        %667 = vmatprep.subr.mxu0 0.0
        %668 = vmatpush1.xpose.msra.mxu0 0.0
        %669 = vmatprep.subr.mxu0 0.0
        %670 = vmatpush1.xpose.msra.mxu0 0.0
        %671 = vmatprep.subr.mxu0 0.0
        %672 = vmatpush1.xpose.msra.mxu0 0.0
        %673 = vmatprep.subr.mxu0 0.0
        %674 = vmatpush1.xpose.msra.mxu0 0.0
        %675 = vmatprep.subr.mxu0 0.0
        %676 = vmatpush1.xpose.msra.mxu0 0.0
        %677 = vmatprep.mubr.f32.mxu0 0.0
        %678 = vmatmul.mubr.f32.gmra.mrb[0].mxu0 %v602
        %v679 = vpop.f32.mrb[0].mxu0
        %v680 = vadd.f32 0.0, %v679
        %v681 = vpop.f32.mrb[0].mxu0
        %682 = vmatprep.mubr.f32.mxu0 0.0
        %683 = vmatmul.mubr.f32.gmra.mrb[0].mxu0 %v605
        %v684 = vpop.f32.mrb[0].mxu0
        %v685 = vadd.f32 0.0, %v684
        %v686 = vpop.f32.mrb[0].mxu0
        %687 = vdwg.mxu0
        %vm688 = vcmask 130048
        %v689 = vsel %vm688, %v680, -inf
        %690 = vmax.xlane.f32.xlu0 %v689
        %v691 = vpop.xlane.xlu0 %690
        %v692 = vsel %vm688, %v685, -inf
        %693 = vmax.xlane.f32.xlu0 %v692
        %v694 = vpop.xlane.xlu0 %693
        %v695 = vsub.f32 %v680, %v691
        %v696 = vsub.f32 %v685, %v694
        %v697 = vmul.f32 %v695, 1.442695
        %v698 = vpow.pop %v697
        %v699 = vmul.f32 %v696, 1.442695
        %v700 = vpow.pop %v699
        %v701 = vsel %vm688, %v698, 0.0
        %702 = vadd.xlane.f32.xlu0 %v701
        %v703 = vpop.xlane.xlu0 %702
        %v704 = vsel %vm688, %v700, 0.0
        %705 = vadd.xlane.f32.xlu0 %v704
        %v706 = vpop.xlane.xlu0 %705
        %v707 = vrcp.pop %v703
        %v708 = vrcp.pop %v706
        %v709 = vmul.f32 %v698, %v707
        %v710 = vmul.f32 %v700, %v708
        %711 = vrot.lane.b32.xlu0 %v588, 96
        %v712 = vpop.permute.xlu0 %711
        %713 = vrot.lane.b32.xlu0 %v593, 96
        %v714 = vpop.permute.xlu0 %713
        %v718 = vsel %vm688, %v709, 0
        %v721 = vsel %vm688, %v710, 0
        %723 = vmatprep.subr.mxu0 0.0
        %724 = vmatpush1.msra.mxu0 %v712
        %725 = vmatprep.subr.mxu0 0.0
        %726 = vmatpush1.msra.mxu0 %v714
        %727 = vmatprep.subr.mxu0 0.0
        %728 = vmatpush1.msra.mxu0 0.0
        %729 = vmatprep.subr.mxu0 0.0
        %730 = vmatpush1.msra.mxu0 0.0
        %731 = vmatprep.subr.mxu0 0.0
        %732 = vmatpush1.msra.mxu0 0.0
        %733 = vmatprep.subr.mxu0 0.0
        %734 = vmatpush1.msra.mxu0 0.0
        %735 = vmatprep.subr.mxu0 0.0
        %736 = vmatpush1.msra.mxu0 0.0
        %737 = vmatprep.subr.mxu0 0.0
        %738 = vmatpush1.msra.mxu0 0.0
        %739 = vmatprep.subr.mxu0 0.0
        %740 = vmatpush1.msra.mxu0 0.0
        %741 = vmatprep.subr.mxu0 0.0
        %742 = vmatpush1.msra.mxu0 0.0
        %743 = vmatprep.subr.mxu0 0.0
        %744 = vmatpush1.msra.mxu0 0.0
        %745 = vmatprep.subr.mxu0 0.0
        %746 = vmatpush1.msra.mxu0 0.0
        %747 = vmatprep.subr.mxu0 0.0
        %748 = vmatpush1.msra.mxu0 0.0
        %749 = vmatprep.subr.mxu0 0.0
        %750 = vmatpush1.msra.mxu0 0.0
        %751 = vmatprep.subr.mxu0 0.0
        %752 = vmatpush1.msra.mxu0 0.0
        %753 = vmatprep.subr.mxu0 0.0
        %754 = vmatpush1.msra.mxu0 0.0
        %755 = vmatprep.subr.mxu0 0.0
        %756 = vmatpush1.msra.mxu0 0.0
        %757 = vmatprep.subr.mxu0 0.0
        %758 = vmatpush1.msra.mxu0 0.0
        %759 = vmatprep.subr.mxu0 0.0
        %760 = vmatpush1.msra.mxu0 0.0
        %761 = vmatprep.subr.mxu0 0.0
        %762 = vmatpush1.msra.mxu0 0.0
        %763 = vmatprep.subr.mxu0 0.0
        %764 = vmatpush1.msra.mxu0 0.0
        %765 = vmatprep.subr.mxu0 0.0
        %766 = vmatpush1.msra.mxu0 0.0
        %767 = vmatprep.subr.mxu0 0.0
        %768 = vmatpush1.msra.mxu0 0.0
        %769 = vmatprep.subr.mxu0 0.0
        %770 = vmatpush1.msra.mxu0 0.0
        %771 = vmatprep.subr.mxu0 0.0
        %772 = vmatpush1.msra.mxu0 0.0
        %773 = vmatprep.subr.mxu0 0.0
        %774 = vmatpush1.msra.mxu0 0.0
        %775 = vmatprep.subr.mxu0 0.0
        %776 = vmatpush1.msra.mxu0 0.0
        %777 = vmatprep.subr.mxu0 0.0
        %778 = vmatpush1.msra.mxu0 0.0
        %779 = vmatprep.subr.mxu0 0.0
        %780 = vmatpush1.msra.mxu0 0.0
        %781 = vmatprep.subr.mxu0 0.0
        %782 = vmatpush1.msra.mxu0 0.0
        %783 = vmatprep.subr.mxu0 0.0
        %784 = vmatpush1.msra.mxu0 0.0
        %785 = vmatprep.subr.mxu0 0.0
        %786 = vmatpush1.msra.mxu0 0.0
        %787 = vmatprep.mubr.f32.mxu0 0.0
        %788 = vmatmul.mubr.f32.gmra.mrb[0].mxu0 %v718
        %v789 = vpop.f32.mrb[0].mxu0
        %v790 = vadd.f32 0.0, %v789
        %v791 = vpop.f32.mrb[0].mxu0
        %792 = vmatprep.mubr.f32.mxu0 0.0
        %793 = vmatmul.mubr.f32.gmra.mrb[0].mxu0 %v721
        %v794 = vpop.f32.mrb[0].mxu0
        %v795 = vadd.f32 0.0, %v794
        %v796 = vpop.f32.mrb[0].mxu0
        %797 = vdwg.mxu0
        %798 = vrot.lane.b32.xlu0 %v463, 120
        %v799 = vpop.permute.xlu0 %798
        %800 = vrot.lane.b32.xlu0 %v464, 120
        %v801 = vpop.permute.xlu0 %800
        %802 = vrot.lane.b32.xlu0 %v588, 120
        %v803 = vpop.permute.xlu0 %802
        %804 = vrot.lane.b32.xlu0 %v593, 120
        %v805 = vpop.permute.xlu0 %804
        %v806 = vsel %vm600, %v799, 0
        %v808 = vsel %vm600, %v801, 0
        %v810 = vsel %vm600, %v803, 0
        %v812 = vsel %vm600, %v805, 0
        %814 = vmatprep.subr.mxu0 0.0
        %815 = vmatpush1.xpose.msra.mxu0 %v810
        %816 = vmatprep.subr.mxu0 0.0
        %817 = vmatpush1.xpose.msra.mxu0 %v812
        %818 = vmatprep.subr.mxu0 0.0
        %819 = vmatpush1.xpose.msra.mxu0 0.0
        %820 = vmatprep.subr.mxu0 0.0
        %821 = vmatpush1.xpose.msra.mxu0 0.0
        %822 = vmatprep.subr.mxu0 0.0
        %823 = vmatpush1.xpose.msra.mxu0 0.0
        %824 = vmatprep.subr.mxu0 0.0
        %825 = vmatpush1.xpose.msra.mxu0 0.0
        %826 = vmatprep.subr.mxu0 0.0
        %827 = vmatpush1.xpose.msra.mxu0 0.0
        %828 = vmatprep.subr.mxu0 0.0
        %829 = vmatpush1.xpose.msra.mxu0 0.0
        %830 = vmatprep.subr.mxu0 0.0
        %831 = vmatpush1.xpose.msra.mxu0 0.0
        %832 = vmatprep.subr.mxu0 0.0
        %833 = vmatpush1.xpose.msra.mxu0 0.0
        %834 = vmatprep.subr.mxu0 0.0
        %835 = vmatpush1.xpose.msra.mxu0 0.0
        %836 = vmatprep.subr.mxu0 0.0
        %837 = vmatpush1.xpose.msra.mxu0 0.0
        %838 = vmatprep.subr.mxu0 0.0
        %839 = vmatpush1.xpose.msra.mxu0 0.0
        %840 = vmatprep.subr.mxu0 0.0
        %841 = vmatpush1.xpose.msra.mxu0 0.0
        %842 = vmatprep.subr.mxu0 0.0
        %843 = vmatpush1.xpose.msra.mxu0 0.0
        %844 = vmatprep.subr.mxu0 0.0
        %845 = vmatpush1.xpose.msra.mxu0 0.0
        %846 = vmatprep.subr.mxu0 0.0
        %847 = vmatpush1.xpose.msra.mxu0 0.0
        %848 = vmatprep.subr.mxu0 0.0
        %849 = vmatpush1.xpose.msra.mxu0 0.0
        %850 = vmatprep.subr.mxu0 0.0
        %851 = vmatpush1.xpose.msra.mxu0 0.0
        %852 = vmatprep.subr.mxu0 0.0
        %853 = vmatpush1.xpose.msra.mxu0 0.0
        %854 = vmatprep.subr.mxu0 0.0
        %855 = vmatpush1.xpose.msra.mxu0 0.0
        %856 = vmatprep.subr.mxu0 0.0
        %857 = vmatpush1.xpose.msra.mxu0 0.0
        %858 = vmatprep.subr.mxu0 0.0
        %859 = vmatpush1.xpose.msra.mxu0 0.0
        %860 = vmatprep.subr.mxu0 0.0
        %861 = vmatpush1.xpose.msra.mxu0 0.0
        %862 = vmatprep.subr.mxu0 0.0
        %863 = vmatpush1.xpose.msra.mxu0 0.0
        %864 = vmatprep.subr.mxu0 0.0
        %865 = vmatpush1.xpose.msra.mxu0 0.0
        %866 = vmatprep.subr.mxu0 0.0
        %867 = vmatpush1.xpose.msra.mxu0 0.0
        %868 = vmatprep.subr.mxu0 0.0
        %869 = vmatpush1.xpose.msra.mxu0 0.0
        %870 = vmatprep.subr.mxu0 0.0
        %871 = vmatpush1.xpose.msra.mxu0 0.0
        %872 = vmatprep.subr.mxu0 0.0
        %873 = vmatpush1.xpose.msra.mxu0 0.0
        %874 = vmatprep.subr.mxu0 0.0
        %875 = vmatpush1.xpose.msra.mxu0 0.0
        %876 = vmatprep.subr.mxu0 0.0
        %877 = vmatpush1.xpose.msra.mxu0 0.0
        %878 = vmatprep.mubr.f32.mxu0 0.0
        %879 = vmatmul.mubr.f32.gmra.mrb[0].mxu0 %v806
        %v880 = vpop.f32.mrb[0].mxu0
        %v881 = vadd.f32 0.0, %v880
        %v882 = vpop.f32.mrb[0].mxu0
        %883 = vmatprep.mubr.f32.mxu0 0.0
        %884 = vmatmul.mubr.f32.gmra.mrb[0].mxu0 %v808
        %v885 = vpop.f32.mrb[0].mxu0
        %v886 = vadd.f32 0.0, %v885
        %v887 = vpop.f32.mrb[0].mxu0
        %888 = vdwg.mxu0
        %v889 = vsel %vm688, %v881, -inf
        %890 = vmax.xlane.f32.xlu0 %v889
        %v891 = vpop.xlane.xlu0 %890
        %v892 = vsel %vm688, %v886, -inf
        %893 = vmax.xlane.f32.xlu0 %v892
        %v894 = vpop.xlane.xlu0 %893
        %v895 = vsub.f32 %v881, %v891
        %v896 = vsub.f32 %v886, %v894
        %v897 = vmul.f32 %v895, 1.442695
        %v898 = vpow.pop %v897
        %v899 = vmul.f32 %v896, 1.442695
        %v900 = vpow.pop %v899
        %v901 = vsel %vm688, %v898, 0.0
        %902 = vadd.xlane.f32.xlu0 %v901
        %v903 = vpop.xlane.xlu0 %902
        %v904 = vsel %vm688, %v900, 0.0
        %905 = vadd.xlane.f32.xlu0 %v904
        %v906 = vpop.xlane.xlu0 %905
        %v907 = vrcp.pop %v903
        %v908 = vrcp.pop %v906
        %v909 = vmul.f32 %v898, %v907
        %v910 = vmul.f32 %v900, %v908
        %911 = vrot.lane.b32.xlu0 %v588, 88
        %v912 = vpop.permute.xlu0 %911
        %913 = vrot.lane.b32.xlu0 %v593, 88
        %v914 = vpop.permute.xlu0 %913
        %v918 = vsel %vm688, %v909, 0
        %v921 = vsel %vm688, %v910, 0
        %923 = vmatprep.subr.mxu0 0.0
        %924 = vmatpush1.msra.mxu0 %v912
        %925 = vmatprep.subr.mxu0 0.0
        %926 = vmatpush1.msra.mxu0 %v914
        %927 = vmatprep.subr.mxu0 0.0
        %928 = vmatpush1.msra.mxu0 0.0
        %929 = vmatprep.subr.mxu0 0.0
        %930 = vmatpush1.msra.mxu0 0.0
        %931 = vmatprep.subr.mxu0 0.0
        %932 = vmatpush1.msra.mxu0 0.0
        %933 = vmatprep.subr.mxu0 0.0
        %934 = vmatpush1.msra.mxu0 0.0
        %935 = vmatprep.subr.mxu0 0.0
        %936 = vmatpush1.msra.mxu0 0.0
        %937 = vmatprep.subr.mxu0 0.0
        %938 = vmatpush1.msra.mxu0 0.0
        %939 = vmatprep.subr.mxu0 0.0
        %940 = vmatpush1.msra.mxu0 0.0
        %941 = vmatprep.subr.mxu0 0.0
        %942 = vmatpush1.msra.mxu0 0.0
        %943 = vmatprep.subr.mxu0 0.0
        %944 = vmatpush1.msra.mxu0 0.0
        %945 = vmatprep.subr.mxu0 0.0
        %946 = vmatpush1.msra.mxu0 0.0
        %947 = vmatprep.subr.mxu0 0.0
        %948 = vmatpush1.msra.mxu0 0.0
        %949 = vmatprep.subr.mxu0 0.0
        %950 = vmatpush1.msra.mxu0 0.0
        %951 = vmatprep.subr.mxu0 0.0
        %952 = vmatpush1.msra.mxu0 0.0
        %953 = vmatprep.subr.mxu0 0.0
        %954 = vmatpush1.msra.mxu0 0.0
        %955 = vmatprep.subr.mxu0 0.0
        %956 = vmatpush1.msra.mxu0 0.0
        %957 = vmatprep.subr.mxu0 0.0
        %958 = vmatpush1.msra.mxu0 0.0
        %959 = vmatprep.subr.mxu0 0.0
        %960 = vmatpush1.msra.mxu0 0.0
        %961 = vmatprep.subr.mxu0 0.0
        %962 = vmatpush1.msra.mxu0 0.0
        %963 = vmatprep.subr.mxu0 0.0
        %964 = vmatpush1.msra.mxu0 0.0
        %965 = vmatprep.subr.mxu0 0.0
        %966 = vmatpush1.msra.mxu0 0.0
        %967 = vmatprep.subr.mxu0 0.0
        %968 = vmatpush1.msra.mxu0 0.0
        %969 = vmatprep.subr.mxu0 0.0
        %970 = vmatpush1.msra.mxu0 0.0
        %971 = vmatprep.subr.mxu0 0.0
        %972 = vmatpush1.msra.mxu0 0.0
        %973 = vmatprep.subr.mxu0 0.0
        %974 = vmatpush1.msra.mxu0 0.0
        %975 = vmatprep.subr.mxu0 0.0
        %976 = vmatpush1.msra.mxu0 0.0
        %977 = vmatprep.subr.mxu0 0.0
        %978 = vmatpush1.msra.mxu0 0.0
        %979 = vmatprep.subr.mxu0 0.0
        %980 = vmatpush1.msra.mxu0 0.0
        %981 = vmatprep.subr.mxu0 0.0
        %982 = vmatpush1.msra.mxu0 0.0
        %983 = vmatprep.subr.mxu0 0.0
        %984 = vmatpush1.msra.mxu0 0.0
        %985 = vmatprep.subr.mxu0 0.0
        %986 = vmatpush1.msra.mxu0 0.0
        %987 = vmatprep.mubr.f32.mxu0 0.0
        %988 = vmatmul.mubr.f32.gmra.mrb[0].mxu0 %v918
        %v989 = vpop.f32.mrb[0].mxu0
        %v990 = vadd.f32 0.0, %v989
        %v991 = vpop.f32.mrb[0].mxu0
        %992 = vmatprep.mubr.f32.mxu0 0.0
        %993 = vmatmul.mubr.f32.gmra.mrb[0].mxu0 %v921
        %v994 = vpop.f32.mrb[0].mxu0
        %v995 = vadd.f32 0.0, %v994
        %v996 = vpop.f32.mrb[0].mxu0
        %997 = vdwg.mxu0
        %v999 = vsel %vm600, %v990, 0
        %v1002 = vsel %vm600, %v995, 0
        %1004 = vmatprep.subr.mxu0 0.0
        %1005 = vmatpush1.msra.mxu0 %v597
        %1006 = vmatprep.subr.mxu0 0.0
        %1007 = vmatpush1.msra.mxu0 0.0
        %1008 = vmatprep.subr.mxu0 0.0
        %1009 = vmatpush1.msra.mxu0 0.0
        %1010 = vmatprep.subr.mxu0 0.0
        %1011 = vmatpush1.msra.mxu0 0.0
        %1012 = vmatprep.subr.mxu0 0.0
        %1013 = vmatpush1.msra.mxu0 0.0
        %1014 = vmatprep.subr.mxu0 0.0
        %1015 = vmatpush1.msra.mxu0 0.0
        %1016 = vmatprep.subr.mxu0 0.0
        %1017 = vmatpush1.msra.mxu0 0.0
        %1018 = vmatprep.subr.mxu0 0.0
        %1019 = vmatpush1.msra.mxu0 0.0
        %1020 = vmatprep.subr.mxu0 0.0
        %1021 = vmatpush1.msra.mxu0 0.0
        %1022 = vmatprep.subr.mxu0 0.0
        %1023 = vmatpush1.msra.mxu0 0.0
        %1024 = vmatprep.subr.mxu0 0.0
        %1025 = vmatpush1.msra.mxu0 0.0
        %1026 = vmatprep.subr.mxu0 0.0
        %1027 = vmatpush1.msra.mxu0 0.0
        %1028 = vmatprep.subr.mxu0 0.0
        %1029 = vmatpush1.msra.mxu0 0.0
        %1030 = vmatprep.subr.mxu0 0.0
        %1031 = vmatpush1.msra.mxu0 0.0
        %1032 = vmatprep.subr.mxu0 0.0
        %1033 = vmatpush1.msra.mxu0 0.0
        %1034 = vmatprep.subr.mxu0 0.0
        %1035 = vmatpush1.msra.mxu0 0.0
        %1036 = vmatprep.subr.mxu0 0.0
        %1037 = vmatpush1.msra.mxu0 0.0
        %1038 = vmatprep.subr.mxu0 0.0
        %1039 = vmatpush1.msra.mxu0 0.0
        %1040 = vmatprep.subr.mxu0 0.0
        %1041 = vmatpush1.msra.mxu0 0.0
        %1042 = vmatprep.subr.mxu0 0.0
        %1043 = vmatpush1.msra.mxu0 0.0
        %1044 = vmatprep.subr.mxu0 0.0
        %1045 = vmatpush1.msra.mxu0 0.0
        %1046 = vmatprep.subr.mxu0 0.0
        %1047 = vmatpush1.msra.mxu0 0.0
        %1048 = vmatprep.subr.mxu0 0.0
        %1049 = vmatpush1.msra.mxu0 0.0
        %1050 = vmatprep.subr.mxu0 0.0
        %1051 = vmatpush1.msra.mxu0 0.0
        %1052 = vmatprep.subr.mxu0 0.0
        %1053 = vmatpush1.msra.mxu0 0.0
        %1054 = vmatprep.subr.mxu0 0.0
        %1055 = vmatpush1.msra.mxu0 0.0
        %1056 = vmatprep.subr.mxu0 0.0
        %1057 = vmatpush1.msra.mxu0 0.0
        %1058 = vmatprep.subr.mxu0 0.0
        %1059 = vmatpush1.msra.mxu0 0.0
        %1060 = vmatprep.subr.mxu0 0.0
        %1061 = vmatpush1.msra.mxu0 0.0
        %1062 = vmatprep.subr.mxu0 0.0
        %1063 = vmatpush1.msra.mxu0 0.0
        %1064 = vmatprep.subr.mxu0 0.0
        %1065 = vmatpush1.msra.mxu0 0.0
        %1066 = vmatprep.subr.mxu0 0.0
        %1067 = vmatpush1.msra.mxu0 0.0
        %1068 = vmatprep.mubr.f32.mxu0 0.0
        %1069 = vmatmul.mubr.f32.gmra.mrb[0].mxu0 %v999
        %v1070 = vpop.f32.mrb[0].mxu0
        %v1071 = vadd.f32 0.0, %v1070
        %v1072 = vpop.f32.mrb[0].mxu0
        %1073 = vmatprep.mubr.f32.mxu0 0.0
        %1074 = vmatmul.mubr.f32.gmra.mrb[0].mxu0 %v1002
        %v1075 = vpop.f32.mrb[0].mxu0
        %v1076 = vadd.f32 0.0, %v1075
        %v1077 = vpop.f32.mrb[0].mxu0
        %1078 = vdwg.mxu0
        %v1080 = vsel %vm600, %v790, 0
        %v1083 = vsel %vm600, %v795, 0
        %1085 = vmatprep.subr.mxu0 0.0
        %1086 = vmatpush1.msra.mxu0 %v596
        %1087 = vmatprep.subr.mxu0 0.0
        %1088 = vmatpush1.msra.mxu0 0.0
        %1089 = vmatprep.subr.mxu0 0.0
        %1090 = vmatpush1.msra.mxu0 0.0
        %1091 = vmatprep.subr.mxu0 0.0
        %1092 = vmatpush1.msra.mxu0 0.0
        %1093 = vmatprep.subr.mxu0 0.0
        %1094 = vmatpush1.msra.mxu0 0.0
        %1095 = vmatprep.subr.mxu0 0.0
        %1096 = vmatpush1.msra.mxu0 0.0
        %1097 = vmatprep.subr.mxu0 0.0
        %1098 = vmatpush1.msra.mxu0 0.0
        %1099 = vmatprep.subr.mxu0 0.0
        %1100 = vmatpush1.msra.mxu0 0.0
        %1101 = vmatprep.subr.mxu0 0.0
        %1102 = vmatpush1.msra.mxu0 0.0
        %1103 = vmatprep.subr.mxu0 0.0
        %1104 = vmatpush1.msra.mxu0 0.0
        %1105 = vmatprep.subr.mxu0 0.0
        %1106 = vmatpush1.msra.mxu0 0.0
        %1107 = vmatprep.subr.mxu0 0.0
        %1108 = vmatpush1.msra.mxu0 0.0
        %1109 = vmatprep.subr.mxu0 0.0
        %1110 = vmatpush1.msra.mxu0 0.0
        %1111 = vmatprep.subr.mxu0 0.0
        %1112 = vmatpush1.msra.mxu0 0.0
        %1113 = vmatprep.subr.mxu0 0.0
        %1114 = vmatpush1.msra.mxu0 0.0
        %1115 = vmatprep.subr.mxu0 0.0
        %1116 = vmatpush1.msra.mxu0 0.0
        %1117 = vmatprep.subr.mxu0 0.0
        %1118 = vmatpush1.msra.mxu0 0.0
        %1119 = vmatprep.subr.mxu0 0.0
        %1120 = vmatpush1.msra.mxu0 0.0
        %1121 = vmatprep.subr.mxu0 0.0
        %1122 = vmatpush1.msra.mxu0 0.0
        %1123 = vmatprep.subr.mxu0 0.0
        %1124 = vmatpush1.msra.mxu0 0.0
        %1125 = vmatprep.subr.mxu0 0.0
        %1126 = vmatpush1.msra.mxu0 0.0
        %1127 = vmatprep.subr.mxu0 0.0
        %1128 = vmatpush1.msra.mxu0 0.0
        %1129 = vmatprep.subr.mxu0 0.0
        %1130 = vmatpush1.msra.mxu0 0.0
        %1131 = vmatprep.subr.mxu0 0.0
        %1132 = vmatpush1.msra.mxu0 0.0
        %1133 = vmatprep.subr.mxu0 0.0
        %1134 = vmatpush1.msra.mxu0 0.0
        %1135 = vmatprep.subr.mxu0 0.0
        %1136 = vmatpush1.msra.mxu0 0.0
        %1137 = vmatprep.subr.mxu0 0.0
        %1138 = vmatpush1.msra.mxu0 0.0
        %1139 = vmatprep.subr.mxu0 0.0
        %1140 = vmatpush1.msra.mxu0 0.0
        %1141 = vmatprep.subr.mxu0 0.0
        %1142 = vmatpush1.msra.mxu0 0.0
        %1143 = vmatprep.subr.mxu0 0.0
        %1144 = vmatpush1.msra.mxu0 0.0
        %1145 = vmatprep.subr.mxu0 0.0
        %1146 = vmatpush1.msra.mxu0 0.0
        %1147 = vmatprep.subr.mxu0 0.0
        %1148 = vmatpush1.msra.mxu0 0.0
        %1149 = vmatprep.mubr.f32.mxu0 0.0
        %1150 = vmatmul.mubr.f32.gmra.mrb[0].mxu0 %v1080
        %v1151 = vpop.f32.mrb[0].mxu0
        %v1152 = vadd.f32 %v1071, %v1151
        %v1153 = vpop.f32.mrb[0].mxu0
        %1154 = vmatprep.mubr.f32.mxu0 0.0
        %1155 = vmatmul.mubr.f32.gmra.mrb[0].mxu0 %v1083
        %v1156 = vpop.f32.mrb[0].mxu0
        %v1157 = vadd.f32 %v1076, %v1156
        %v1158 = vpop.f32.mrb[0].mxu0
        %1159 = vdwg.mxu0
        %1160 = vrot.lane.b32.xlu0 %v463, 112
        %v1161 = vpop.permute.xlu0 %1160
        %1162 = vrot.lane.b32.xlu0 %v464, 112
        %v1163 = vpop.permute.xlu0 %1162
        %1164 = vrot.lane.b32.xlu0 %v588, 112
        %v1165 = vpop.permute.xlu0 %1164
        %1166 = vrot.lane.b32.xlu0 %v593, 112
        %v1167 = vpop.permute.xlu0 %1166
        %v1168 = vsel %vm600, %v1161, 0
        %v1170 = vsel %vm600, %v1163, 0
        %v1172 = vsel %vm600, %v1165, 0
        %v1174 = vsel %vm600, %v1167, 0
        %1176 = vmatprep.subr.mxu0 0.0
        %1177 = vmatpush1.xpose.msra.mxu0 %v1172
        %1178 = vmatprep.subr.mxu0 0.0
        %1179 = vmatpush1.xpose.msra.mxu0 %v1174
        %1180 = vmatprep.subr.mxu0 0.0
        %1181 = vmatpush1.xpose.msra.mxu0 0.0
        %1182 = vmatprep.subr.mxu0 0.0
        %1183 = vmatpush1.xpose.msra.mxu0 0.0
        %1184 = vmatprep.subr.mxu0 0.0
        %1185 = vmatpush1.xpose.msra.mxu0 0.0
        %1186 = vmatprep.subr.mxu0 0.0
        %1187 = vmatpush1.xpose.msra.mxu0 0.0
        %1188 = vmatprep.subr.mxu0 0.0
        %1189 = vmatpush1.xpose.msra.mxu0 0.0
        %1190 = vmatprep.subr.mxu0 0.0
        %1191 = vmatpush1.xpose.msra.mxu0 0.0
        %1192 = vmatprep.subr.mxu0 0.0
        %1193 = vmatpush1.xpose.msra.mxu0 0.0
        %1194 = vmatprep.subr.mxu0 0.0
        %1195 = vmatpush1.xpose.msra.mxu0 0.0
        %1196 = vmatprep.subr.mxu0 0.0
        %1197 = vmatpush1.xpose.msra.mxu0 0.0
        %1198 = vmatprep.subr.mxu0 0.0
        %1199 = vmatpush1.xpose.msra.mxu0 0.0
        %1200 = vmatprep.subr.mxu0 0.0
        %1201 = vmatpush1.xpose.msra.mxu0 0.0
        %1202 = vmatprep.subr.mxu0 0.0
        %1203 = vmatpush1.xpose.msra.mxu0 0.0
        %1204 = vmatprep.subr.mxu0 0.0
        %1205 = vmatpush1.xpose.msra.mxu0 0.0
        %1206 = vmatprep.subr.mxu0 0.0
        %1207 = vmatpush1.xpose.msra.mxu0 0.0
        %1208 = vmatprep.subr.mxu0 0.0
        %1209 = vmatpush1.xpose.msra.mxu0 0.0
        %1210 = vmatprep.subr.mxu0 0.0
        %1211 = vmatpush1.xpose.msra.mxu0 0.0
        %1212 = vmatprep.subr.mxu0 0.0
        %1213 = vmatpush1.xpose.msra.mxu0 0.0
        %1214 = vmatprep.subr.mxu0 0.0
        %1215 = vmatpush1.xpose.msra.mxu0 0.0
        %1216 = vmatprep.subr.mxu0 0.0
        %1217 = vmatpush1.xpose.msra.mxu0 0.0
        %1218 = vmatprep.subr.mxu0 0.0
        %1219 = vmatpush1.xpose.msra.mxu0 0.0
        %1220 = vmatprep.subr.mxu0 0.0
        %1221 = vmatpush1.xpose.msra.mxu0 0.0
        %1222 = vmatprep.subr.mxu0 0.0
        %1223 = vmatpush1.xpose.msra.mxu0 0.0
        %1224 = vmatprep.subr.mxu0 0.0
        %1225 = vmatpush1.xpose.msra.mxu0 0.0
        %1226 = vmatprep.subr.mxu0 0.0
        %1227 = vmatpush1.xpose.msra.mxu0 0.0
        %1228 = vmatprep.subr.mxu0 0.0
        %1229 = vmatpush1.xpose.msra.mxu0 0.0
        %1230 = vmatprep.subr.mxu0 0.0
        %1231 = vmatpush1.xpose.msra.mxu0 0.0
        %1232 = vmatprep.subr.mxu0 0.0
        %1233 = vmatpush1.xpose.msra.mxu0 0.0
        %1234 = vmatprep.subr.mxu0 0.0
        %1235 = vmatpush1.xpose.msra.mxu0 0.0
        %1236 = vmatprep.subr.mxu0 0.0
        %1237 = vmatpush1.xpose.msra.mxu0 0.0
        %1238 = vmatprep.subr.mxu0 0.0
        %1239 = vmatpush1.xpose.msra.mxu0 0.0
        %1240 = vmatprep.mubr.f32.mxu0 0.0
        %1241 = vmatmul.mubr.f32.gmra.mrb[0].mxu0 %v1168
        %v1242 = vpop.f32.mrb[0].mxu0
        %v1243 = vadd.f32 0.0, %v1242
        %v1244 = vpop.f32.mrb[0].mxu0
        %1245 = vmatprep.mubr.f32.mxu0 0.0
        %1246 = vmatmul.mubr.f32.gmra.mrb[0].mxu0 %v1170
        %v1247 = vpop.f32.mrb[0].mxu0
        %v1248 = vadd.f32 0.0, %v1247
        %v1249 = vpop.f32.mrb[0].mxu0
        %1250 = vdwg.mxu0
        %v1251 = vsel %vm688, %v1243, -inf
        %1252 = vmax.xlane.f32.xlu0 %v1251
        %v1253 = vpop.xlane.xlu0 %1252
        %v1254 = vsel %vm688, %v1248, -inf
        %1255 = vmax.xlane.f32.xlu0 %v1254
        %v1256 = vpop.xlane.xlu0 %1255
        %v1257 = vsub.f32 %v1243, %v1253
        %v1258 = vsub.f32 %v1248, %v1256
        %v1259 = vmul.f32 %v1257, 1.442695
        %v1260 = vpow.pop %v1259
        %v1261 = vmul.f32 %v1258, 1.442695
        %v1262 = vpow.pop %v1261
        %v1263 = vsel %vm688, %v1260, 0.0
        %1264 = vadd.xlane.f32.xlu0 %v1263
        %v1265 = vpop.xlane.xlu0 %1264
        %v1266 = vsel %vm688, %v1262, 0.0
        %1267 = vadd.xlane.f32.xlu0 %v1266
        %v1268 = vpop.xlane.xlu0 %1267
        %v1269 = vrcp.pop %v1265
        %v1270 = vrcp.pop %v1268
        %v1271 = vmul.f32 %v1260, %v1269
        %v1272 = vmul.f32 %v1262, %v1270
        %1273 = vrot.lane.b32.xlu0 %v588, 80
        %v1274 = vpop.permute.xlu0 %1273
        %1275 = vrot.lane.b32.xlu0 %v593, 80
        %v1276 = vpop.permute.xlu0 %1275
        %v1280 = vsel %vm688, %v1271, 0
        %v1283 = vsel %vm688, %v1272, 0
        %1285 = vmatprep.subr.mxu0 0.0
        %1286 = vmatpush1.msra.mxu0 %v1274
        %1287 = vmatprep.subr.mxu0 0.0
        %1288 = vmatpush1.msra.mxu0 %v1276
        %1289 = vmatprep.subr.mxu0 0.0
        %1290 = vmatpush1.msra.mxu0 0.0
        %1291 = vmatprep.subr.mxu0 0.0
        %1292 = vmatpush1.msra.mxu0 0.0
        %1293 = vmatprep.subr.mxu0 0.0
        %1294 = vmatpush1.msra.mxu0 0.0
        %1295 = vmatprep.subr.mxu0 0.0
        %1296 = vmatpush1.msra.mxu0 0.0
        %1297 = vmatprep.subr.mxu0 0.0
        %1298 = vmatpush1.msra.mxu0 0.0
        %1299 = vmatprep.subr.mxu0 0.0
        %1300 = vmatpush1.msra.mxu0 0.0
        %1301 = vmatprep.subr.mxu0 0.0
        %1302 = vmatpush1.msra.mxu0 0.0
        %1303 = vmatprep.subr.mxu0 0.0
        %1304 = vmatpush1.msra.mxu0 0.0
        %1305 = vmatprep.subr.mxu0 0.0
        %1306 = vmatpush1.msra.mxu0 0.0
        %1307 = vmatprep.subr.mxu0 0.0
        %1308 = vmatpush1.msra.mxu0 0.0
        %1309 = vmatprep.subr.mxu0 0.0
        %1310 = vmatpush1.msra.mxu0 0.0
        %1311 = vmatprep.subr.mxu0 0.0
        %1312 = vmatpush1.msra.mxu0 0.0
        %1313 = vmatprep.subr.mxu0 0.0
        %1314 = vmatpush1.msra.mxu0 0.0
        %1315 = vmatprep.subr.mxu0 0.0
        %1316 = vmatpush1.msra.mxu0 0.0
        %1317 = vmatprep.subr.mxu0 0.0
        %1318 = vmatpush1.msra.mxu0 0.0
        %1319 = vmatprep.subr.mxu0 0.0
        %1320 = vmatpush1.msra.mxu0 0.0
        %1321 = vmatprep.subr.mxu0 0.0
        %1322 = vmatpush1.msra.mxu0 0.0
        %1323 = vmatprep.subr.mxu0 0.0
        %1324 = vmatpush1.msra.mxu0 0.0
        %1325 = vmatprep.subr.mxu0 0.0
        %1326 = vmatpush1.msra.mxu0 0.0
        %1327 = vmatprep.subr.mxu0 0.0
        %1328 = vmatpush1.msra.mxu0 0.0
        %1329 = vmatprep.subr.mxu0 0.0
        %1330 = vmatpush1.msra.mxu0 0.0
        %1331 = vmatprep.subr.mxu0 0.0
        %1332 = vmatpush1.msra.mxu0 0.0
        %1333 = vmatprep.subr.mxu0 0.0
        %1334 = vmatpush1.msra.mxu0 0.0
        %1335 = vmatprep.subr.mxu0 0.0
        %1336 = vmatpush1.msra.mxu0 0.0
        %1337 = vmatprep.subr.mxu0 0.0
        %1338 = vmatpush1.msra.mxu0 0.0
        %1339 = vmatprep.subr.mxu0 0.0
        %1340 = vmatpush1.msra.mxu0 0.0
        %1341 = vmatprep.subr.mxu0 0.0
        %1342 = vmatpush1.msra.mxu0 0.0
        %1343 = vmatprep.subr.mxu0 0.0
        %1344 = vmatpush1.msra.mxu0 0.0
        %1345 = vmatprep.subr.mxu0 0.0
        %1346 = vmatpush1.msra.mxu0 0.0
        %1347 = vmatprep.subr.mxu0 0.0
        %1348 = vmatpush1.msra.mxu0 0.0
        %1349 = vmatprep.mubr.f32.mxu0 0.0
        %1350 = vmatmul.mubr.f32.gmra.mrb[0].mxu0 %v1280
        %v1351 = vpop.f32.mrb[0].mxu0
        %v1352 = vadd.f32 0.0, %v1351
        %v1353 = vpop.f32.mrb[0].mxu0
        %1354 = vmatprep.mubr.f32.mxu0 0.0
        %1355 = vmatmul.mubr.f32.gmra.mrb[0].mxu0 %v1283
        %v1356 = vpop.f32.mrb[0].mxu0
        %v1357 = vadd.f32 0.0, %v1356
        %v1358 = vpop.f32.mrb[0].mxu0
        %1359 = vdwg.mxu0
        %v1361 = vsel %vm600, %v1352, 0
        %v1364 = vsel %vm600, %v1357, 0
        %1366 = vmatprep.subr.mxu0 0.0
        %1367 = vmatpush1.msra.mxu0 %v598
        %1368 = vmatprep.subr.mxu0 0.0
        %1369 = vmatpush1.msra.mxu0 0.0
        %1370 = vmatprep.subr.mxu0 0.0
        %1371 = vmatpush1.msra.mxu0 0.0
        %1372 = vmatprep.subr.mxu0 0.0
        %1373 = vmatpush1.msra.mxu0 0.0
        %1374 = vmatprep.subr.mxu0 0.0
        %1375 = vmatpush1.msra.mxu0 0.0
        %1376 = vmatprep.subr.mxu0 0.0
        %1377 = vmatpush1.msra.mxu0 0.0
        %1378 = vmatprep.subr.mxu0 0.0
        %1379 = vmatpush1.msra.mxu0 0.0
        %1380 = vmatprep.subr.mxu0 0.0
        %1381 = vmatpush1.msra.mxu0 0.0
        %1382 = vmatprep.subr.mxu0 0.0
        %1383 = vmatpush1.msra.mxu0 0.0
        %1384 = vmatprep.subr.mxu0 0.0
        %1385 = vmatpush1.msra.mxu0 0.0
        %1386 = vmatprep.subr.mxu0 0.0
        %1387 = vmatpush1.msra.mxu0 0.0
        %1388 = vmatprep.subr.mxu0 0.0
        %1389 = vmatpush1.msra.mxu0 0.0
        %1390 = vmatprep.subr.mxu0 0.0
        %1391 = vmatpush1.msra.mxu0 0.0
        %1392 = vmatprep.subr.mxu0 0.0
        %1393 = vmatpush1.msra.mxu0 0.0
        %1394 = vmatprep.subr.mxu0 0.0
        %1395 = vmatpush1.msra.mxu0 0.0
        %1396 = vmatprep.subr.mxu0 0.0
        %1397 = vmatpush1.msra.mxu0 0.0
        %1398 = vmatprep.subr.mxu0 0.0
        %1399 = vmatpush1.msra.mxu0 0.0
        %1400 = vmatprep.subr.mxu0 0.0
        %1401 = vmatpush1.msra.mxu0 0.0
        %1402 = vmatprep.subr.mxu0 0.0
        %1403 = vmatpush1.msra.mxu0 0.0
        %1404 = vmatprep.subr.mxu0 0.0
        %1405 = vmatpush1.msra.mxu0 0.0
        %1406 = vmatprep.subr.mxu0 0.0
        %1407 = vmatpush1.msra.mxu0 0.0
        %1408 = vmatprep.subr.mxu0 0.0
        %1409 = vmatpush1.msra.mxu0 0.0
        %1410 = vmatprep.subr.mxu0 0.0
        %1411 = vmatpush1.msra.mxu0 0.0
        %1412 = vmatprep.subr.mxu0 0.0
        %1413 = vmatpush1.msra.mxu0 0.0
        %1414 = vmatprep.subr.mxu0 0.0
        %1415 = vmatpush1.msra.mxu0 0.0
        %1416 = vmatprep.subr.mxu0 0.0
        %1417 = vmatpush1.msra.mxu0 0.0
        %1418 = vmatprep.subr.mxu0 0.0
        %1419 = vmatpush1.msra.mxu0 0.0
        %1420 = vmatprep.subr.mxu0 0.0
        %1421 = vmatpush1.msra.mxu0 0.0
        %1422 = vmatprep.subr.mxu0 0.0
        %1423 = vmatpush1.msra.mxu0 0.0
        %1424 = vmatprep.subr.mxu0 0.0
        %1425 = vmatpush1.msra.mxu0 0.0
        %1426 = vmatprep.subr.mxu0 0.0
        %1427 = vmatpush1.msra.mxu0 0.0
        %1428 = vmatprep.subr.mxu0 0.0
        %1429 = vmatpush1.msra.mxu0 0.0
        %1430 = vmatprep.mubr.f32.mxu0 0.0
        %1431 = vmatmul.mubr.f32.gmra.mrb[0].mxu0 %v1361
        %v1432 = vpop.f32.mrb[0].mxu0
        %v1433 = vadd.f32 0.0, %v1432
        %v1434 = vpop.f32.mrb[0].mxu0
        %1435 = vmatprep.mubr.f32.mxu0 0.0
        %1436 = vmatmul.mubr.f32.gmra.mrb[0].mxu0 %v1364
        %v1437 = vpop.f32.mrb[0].mxu0
        %v1438 = vadd.f32 0.0, %v1437
        %v1439 = vpop.f32.mrb[0].mxu0
        %1440 = vdwg.mxu0
        %v1441 = vadd.f32 %v1152, %v1433
        %v1442 = vadd.f32 %v1157, %v1438
        %1443 = vrot.lane.b32.xlu0 %v463, 104
        %v1444 = vpop.permute.xlu0 %1443
        %1445 = vrot.lane.b32.xlu0 %v464, 104
        %v1446 = vpop.permute.xlu0 %1445
        %1447 = vrot.lane.b32.xlu0 %v588, 104
        %v1448 = vpop.permute.xlu0 %1447
        %1449 = vrot.lane.b32.xlu0 %v593, 104
        %v1450 = vpop.permute.xlu0 %1449
        %v1451 = vsel %vm600, %v1444, 0
        %v1453 = vsel %vm600, %v1446, 0
        %v1455 = vsel %vm600, %v1448, 0
        %v1457 = vsel %vm600, %v1450, 0
        %1459 = vmatprep.subr.mxu0 0.0
        %1460 = vmatpush1.xpose.msra.mxu0 %v1455
        %1461 = vmatprep.subr.mxu0 0.0
        %1462 = vmatpush1.xpose.msra.mxu0 %v1457
        %1463 = vmatprep.subr.mxu0 0.0
        %1464 = vmatpush1.xpose.msra.mxu0 0.0
        %1465 = vmatprep.subr.mxu0 0.0
        %1466 = vmatpush1.xpose.msra.mxu0 0.0
        %1467 = vmatprep.subr.mxu0 0.0
        %1468 = vmatpush1.xpose.msra.mxu0 0.0
        %1469 = vmatprep.subr.mxu0 0.0
        %1470 = vmatpush1.xpose.msra.mxu0 0.0
        %1471 = vmatprep.subr.mxu0 0.0
        %1472 = vmatpush1.xpose.msra.mxu0 0.0
        %1473 = vmatprep.subr.mxu0 0.0
        %1474 = vmatpush1.xpose.msra.mxu0 0.0
        %1475 = vmatprep.subr.mxu0 0.0
        %1476 = vmatpush1.xpose.msra.mxu0 0.0
        %1477 = vmatprep.subr.mxu0 0.0
        %1478 = vmatpush1.xpose.msra.mxu0 0.0
        %1479 = vmatprep.subr.mxu0 0.0
        %1480 = vmatpush1.xpose.msra.mxu0 0.0
        %1481 = vmatprep.subr.mxu0 0.0
        %1482 = vmatpush1.xpose.msra.mxu0 0.0
        %1483 = vmatprep.subr.mxu0 0.0
        %1484 = vmatpush1.xpose.msra.mxu0 0.0
        %1485 = vmatprep.subr.mxu0 0.0
        %1486 = vmatpush1.xpose.msra.mxu0 0.0
        %1487 = vmatprep.subr.mxu0 0.0
        %1488 = vmatpush1.xpose.msra.mxu0 0.0
        %1489 = vmatprep.subr.mxu0 0.0
        %1490 = vmatpush1.xpose.msra.mxu0 0.0
        %1491 = vmatprep.subr.mxu0 0.0
        %1492 = vmatpush1.xpose.msra.mxu0 0.0
        %1493 = vmatprep.subr.mxu0 0.0
        %1494 = vmatpush1.xpose.msra.mxu0 0.0
        %1495 = vmatprep.subr.mxu0 0.0
        %1496 = vmatpush1.xpose.msra.mxu0 0.0
        %1497 = vmatprep.subr.mxu0 0.0
        %1498 = vmatpush1.xpose.msra.mxu0 0.0
        %1499 = vmatprep.subr.mxu0 0.0
        %1500 = vmatpush1.xpose.msra.mxu0 0.0
        %1501 = vmatprep.subr.mxu0 0.0
        %1502 = vmatpush1.xpose.msra.mxu0 0.0
        %1503 = vmatprep.subr.mxu0 0.0
        %1504 = vmatpush1.xpose.msra.mxu0 0.0
        %1505 = vmatprep.subr.mxu0 0.0
        %1506 = vmatpush1.xpose.msra.mxu0 0.0
        %1507 = vmatprep.subr.mxu0 0.0
        %1508 = vmatpush1.xpose.msra.mxu0 0.0
        %1509 = vmatprep.subr.mxu0 0.0
        %1510 = vmatpush1.xpose.msra.mxu0 0.0
        %1511 = vmatprep.subr.mxu0 0.0
        %1512 = vmatpush1.xpose.msra.mxu0 0.0
        %1513 = vmatprep.subr.mxu0 0.0
        %1514 = vmatpush1.xpose.msra.mxu0 0.0
        %1515 = vmatprep.subr.mxu0 0.0
        %1516 = vmatpush1.xpose.msra.mxu0 0.0
        %1517 = vmatprep.subr.mxu0 0.0
        %1518 = vmatpush1.xpose.msra.mxu0 0.0
        %1519 = vmatprep.subr.mxu0 0.0
        %1520 = vmatpush1.xpose.msra.mxu0 0.0
        %1521 = vmatprep.subr.mxu0 0.0
        %1522 = vmatpush1.xpose.msra.mxu0 0.0
        %1523 = vmatprep.mubr.f32.mxu0 0.0
        %1524 = vmatmul.mubr.f32.gmra.mrb[0].mxu0 %v1451
        %v1525 = vpop.f32.mrb[0].mxu0
        %v1526 = vadd.f32 0.0, %v1525
        %v1527 = vpop.f32.mrb[0].mxu0
        %1528 = vmatprep.mubr.f32.mxu0 0.0
        %1529 = vmatmul.mubr.f32.gmra.mrb[0].mxu0 %v1453
        %v1530 = vpop.f32.mrb[0].mxu0
        %v1531 = vadd.f32 0.0, %v1530
        %v1532 = vpop.f32.mrb[0].mxu0
        %1533 = vdwg.mxu0
        %v1534 = vsel %vm688, %v1526, -inf
        %1535 = vmax.xlane.f32.xlu0 %v1534
        %v1536 = vpop.xlane.xlu0 %1535
        %v1537 = vsel %vm688, %v1531, -inf
        %1538 = vmax.xlane.f32.xlu0 %v1537
        %v1539 = vpop.xlane.xlu0 %1538
        %v1540 = vsub.f32 %v1526, %v1536
        %v1541 = vsub.f32 %v1531, %v1539
        %v1542 = vmul.f32 %v1540, 1.442695
        %v1543 = vpow.pop %v1542
        %v1544 = vmul.f32 %v1541, 1.442695
        %v1545 = vpow.pop %v1544
        %v1546 = vsel %vm688, %v1543, 0.0
        %1547 = vadd.xlane.f32.xlu0 %v1546
        %v1548 = vpop.xlane.xlu0 %1547
        %v1549 = vsel %vm688, %v1545, 0.0
        %1550 = vadd.xlane.f32.xlu0 %v1549
        %v1551 = vpop.xlane.xlu0 %1550
        %v1552 = vrcp.pop %v1548
        %v1553 = vrcp.pop %v1551
        %v1554 = vmul.f32 %v1543, %v1552
        %v1555 = vmul.f32 %v1545, %v1553
        %1556 = vrot.lane.b32.xlu0 %v588, 72
        %v1557 = vpop.permute.xlu0 %1556
        %1558 = vrot.lane.b32.xlu0 %v593, 72
        %v1559 = vpop.permute.xlu0 %1558
        %v1563 = vsel %vm688, %v1554, 0
        %v1566 = vsel %vm688, %v1555, 0
        %1568 = vmatprep.subr.mxu0 0.0
        %1569 = vmatpush1.msra.mxu0 %v1557
        %1570 = vmatprep.subr.mxu0 0.0
        %1571 = vmatpush1.msra.mxu0 %v1559
        %1572 = vmatprep.subr.mxu0 0.0
        %1573 = vmatpush1.msra.mxu0 0.0
        %1574 = vmatprep.subr.mxu0 0.0
        %1575 = vmatpush1.msra.mxu0 0.0
        %1576 = vmatprep.subr.mxu0 0.0
        %1577 = vmatpush1.msra.mxu0 0.0
        %1578 = vmatprep.subr.mxu0 0.0
        %1579 = vmatpush1.msra.mxu0 0.0
        %1580 = vmatprep.subr.mxu0 0.0
        %1581 = vmatpush1.msra.mxu0 0.0
        %1582 = vmatprep.subr.mxu0 0.0
        %1583 = vmatpush1.msra.mxu0 0.0
        %1584 = vmatprep.subr.mxu0 0.0
        %1585 = vmatpush1.msra.mxu0 0.0
        %1586 = vmatprep.subr.mxu0 0.0
        %1587 = vmatpush1.msra.mxu0 0.0
        %1588 = vmatprep.subr.mxu0 0.0
        %1589 = vmatpush1.msra.mxu0 0.0
        %1590 = vmatprep.subr.mxu0 0.0
        %1591 = vmatpush1.msra.mxu0 0.0
        %1592 = vmatprep.subr.mxu0 0.0
        %1593 = vmatpush1.msra.mxu0 0.0
        %1594 = vmatprep.subr.mxu0 0.0
        %1595 = vmatpush1.msra.mxu0 0.0
        %1596 = vmatprep.subr.mxu0 0.0
        %1597 = vmatpush1.msra.mxu0 0.0
        %1598 = vmatprep.subr.mxu0 0.0
        %1599 = vmatpush1.msra.mxu0 0.0
        %1600 = vmatprep.subr.mxu0 0.0
        %1601 = vmatpush1.msra.mxu0 0.0
        %1602 = vmatprep.subr.mxu0 0.0
        %1603 = vmatpush1.msra.mxu0 0.0
        %1604 = vmatprep.subr.mxu0 0.0
        %1605 = vmatpush1.msra.mxu0 0.0
        %1606 = vmatprep.subr.mxu0 0.0
        %1607 = vmatpush1.msra.mxu0 0.0
        %1608 = vmatprep.subr.mxu0 0.0
        %1609 = vmatpush1.msra.mxu0 0.0
        %1610 = vmatprep.subr.mxu0 0.0
        %1611 = vmatpush1.msra.mxu0 0.0
        %1612 = vmatprep.subr.mxu0 0.0
        %1613 = vmatpush1.msra.mxu0 0.0
        %1614 = vmatprep.subr.mxu0 0.0
        %1615 = vmatpush1.msra.mxu0 0.0
        %1616 = vmatprep.subr.mxu0 0.0
        %1617 = vmatpush1.msra.mxu0 0.0
        %1618 = vmatprep.subr.mxu0 0.0
        %1619 = vmatpush1.msra.mxu0 0.0
        %1620 = vmatprep.subr.mxu0 0.0
        %1621 = vmatpush1.msra.mxu0 0.0
        %1622 = vmatprep.subr.mxu0 0.0
        %1623 = vmatpush1.msra.mxu0 0.0
        %1624 = vmatprep.subr.mxu0 0.0
        %1625 = vmatpush1.msra.mxu0 0.0
        %1626 = vmatprep.subr.mxu0 0.0
        %1627 = vmatpush1.msra.mxu0 0.0
        %1628 = vmatprep.subr.mxu0 0.0
        %1629 = vmatpush1.msra.mxu0 0.0
        %1630 = vmatprep.subr.mxu0 0.0
        %1631 = vmatpush1.msra.mxu0 0.0
        %1632 = vmatprep.mubr.f32.mxu0 0.0
        %1633 = vmatmul.mubr.f32.gmra.mrb[0].mxu0 %v1563
        %v1634 = vpop.f32.mrb[0].mxu0
        %v1635 = vadd.f32 0.0, %v1634
        %v1636 = vpop.f32.mrb[0].mxu0
        %1637 = vmatprep.mubr.f32.mxu0 0.0
        %1638 = vmatmul.mubr.f32.gmra.mrb[0].mxu0 %v1566
        %v1639 = vpop.f32.mrb[0].mxu0
        %v1640 = vadd.f32 0.0, %v1639
        %v1641 = vpop.f32.mrb[0].mxu0
        %1642 = vdwg.mxu0
        %v1644 = vsel %vm600, %v1635, 0
        %v1647 = vsel %vm600, %v1640, 0
        %1649 = vmatprep.subr.mxu0 0.0
        %1650 = vmatpush1.msra.mxu0 %v599
        %1651 = vmatprep.subr.mxu0 0.0
        %1652 = vmatpush1.msra.mxu0 0.0
        %1653 = vmatprep.subr.mxu0 0.0
        %1654 = vmatpush1.msra.mxu0 0.0
        %1655 = vmatprep.subr.mxu0 0.0
        %1656 = vmatpush1.msra.mxu0 0.0
        %1657 = vmatprep.subr.mxu0 0.0
        %1658 = vmatpush1.msra.mxu0 0.0
        %1659 = vmatprep.subr.mxu0 0.0
        %1660 = vmatpush1.msra.mxu0 0.0
        %1661 = vmatprep.subr.mxu0 0.0
        %1662 = vmatpush1.msra.mxu0 0.0
        %1663 = vmatprep.subr.mxu0 0.0
        %1664 = vmatpush1.msra.mxu0 0.0
        %1665 = vmatprep.subr.mxu0 0.0
        %1666 = vmatpush1.msra.mxu0 0.0
        %1667 = vmatprep.subr.mxu0 0.0
        %1668 = vmatpush1.msra.mxu0 0.0
        %1669 = vmatprep.subr.mxu0 0.0
        %1670 = vmatpush1.msra.mxu0 0.0
        %1671 = vmatprep.subr.mxu0 0.0
        %1672 = vmatpush1.msra.mxu0 0.0
        %1673 = vmatprep.subr.mxu0 0.0
        %1674 = vmatpush1.msra.mxu0 0.0
        %1675 = vmatprep.subr.mxu0 0.0
        %1676 = vmatpush1.msra.mxu0 0.0
        %1677 = vmatprep.subr.mxu0 0.0
        %1678 = vmatpush1.msra.mxu0 0.0
        %1679 = vmatprep.subr.mxu0 0.0
        %1680 = vmatpush1.msra.mxu0 0.0
        %1681 = vmatprep.subr.mxu0 0.0
        %1682 = vmatpush1.msra.mxu0 0.0
        %1683 = vmatprep.subr.mxu0 0.0
        %1684 = vmatpush1.msra.mxu0 0.0
        %1685 = vmatprep.subr.mxu0 0.0
        %1686 = vmatpush1.msra.mxu0 0.0
        %1687 = vmatprep.subr.mxu0 0.0
        %1688 = vmatpush1.msra.mxu0 0.0
        %1689 = vmatprep.subr.mxu0 0.0
        %1690 = vmatpush1.msra.mxu0 0.0
        %1691 = vmatprep.subr.mxu0 0.0
        %1692 = vmatpush1.msra.mxu0 0.0
        %1693 = vmatprep.subr.mxu0 0.0
        %1694 = vmatpush1.msra.mxu0 0.0
        %1695 = vmatprep.subr.mxu0 0.0
        %1696 = vmatpush1.msra.mxu0 0.0
        %1697 = vmatprep.subr.mxu0 0.0
        %1698 = vmatpush1.msra.mxu0 0.0
        %1699 = vmatprep.subr.mxu0 0.0
        %1700 = vmatpush1.msra.mxu0 0.0
        %1701 = vmatprep.subr.mxu0 0.0
        %1702 = vmatpush1.msra.mxu0 0.0
        %1703 = vmatprep.subr.mxu0 0.0
        %1704 = vmatpush1.msra.mxu0 0.0
        %1705 = vmatprep.subr.mxu0 0.0
        %1706 = vmatpush1.msra.mxu0 0.0
        %1707 = vmatprep.subr.mxu0 0.0
        %1708 = vmatpush1.msra.mxu0 0.0
        %1709 = vmatprep.subr.mxu0 0.0
        %1710 = vmatpush1.msra.mxu0 0.0
        %1711 = vmatprep.subr.mxu0 0.0
        %1712 = vmatpush1.msra.mxu0 0.0
        %1713 = vmatprep.mubr.f32.mxu0 0.0
        %1714 = vmatmul.mubr.f32.gmra.mrb[0].mxu0 %v1644
        %v1715 = vpop.f32.mrb[0].mxu0
        %v1716 = vadd.f32 0.0, %v1715
        %v1717 = vpop.f32.mrb[0].mxu0
        %1718 = vmatprep.mubr.f32.mxu0 0.0
        %1719 = vmatmul.mubr.f32.gmra.mrb[0].mxu0 %v1647
        %v1720 = vpop.f32.mrb[0].mxu0
        %v1721 = vadd.f32 0.0, %v1720
        %v1722 = vpop.f32.mrb[0].mxu0
        %1723 = vdwg.mxu0
        %v1724 = vadd.f32 %v1441, %v1716
        %v1725 = vadd.f32 %v1442, %v1721
        %v1726 = vadd.f32 %v459, %v1724
        %v1727 = vadd.f32 %v460, %v1725
        %v1728 = vld [vmem:[%s6] sm:$0x1]
        %v1730 = vlaneseq
        %v1731 = vshrl.u32 %v1730, 7
        %v1732 = vsub.s32 0, %v1731
        %v1733 = vrot.slane %v1728, %v1732
        %v1735 = vadd.f32 %v1726, %v1733
        %v1736 = vadd.f32 %v1727, %v1733
        %v1737 = vld [vmem:[%s7] sm:$0x1]
        %v1738 = vld [vmem:[%s8] sm:$0x1]
        %v1739 = vsel %vm467, %v1735, 0.0
        %1740 = vadd.xlane.f32.xlu0 %v1739
        %v1741 = vpop.xlane.xlu0 %1740
        %v1742 = vsel %vm467, %v1736, 0.0
        %1743 = vadd.xlane.f32.xlu0 %v1742
        %v1744 = vpop.xlane.xlu0 %1743
        %v1745 = vmul.f32 %v1741, %v474
        %v1746 = vmul.f32 %v1744, %v474
        %v1747 = vsub.f32 %v1735, %v1745
        %v1748 = vsub.f32 %v1736, %v1746
        %v1749 = vmul.f32 %v1747, %v1747
        %v1750 = vmul.f32 %v1748, %v1748
        %v1751 = vsel %vm467, %v1749, 0.0
        %1752 = vadd.xlane.f32.xlu0 %v1751
        %v1753 = vpop.xlane.xlu0 %1752
        %v1754 = vsel %vm467, %v1750, 0.0
        %1755 = vadd.xlane.f32.xlu0 %v1754
        %v1756 = vpop.xlane.xlu0 %1755
        %v1757 = vmul.f32 %v1753, %v474
        %v1758 = vmul.f32 %v1756, %v474
        %v1759 = vadd.f32 %v1757, 1e-05
        %v1760 = vadd.f32 %v1758, 1e-05
        %v1761 = vrsqrt.pop %v1759
        %v1762 = vrsqrt.pop %v1760
        %v1763 = vmul.f32 %v1747, %v1761
        %v1764 = vmul.f32 %v1748, %v1762
        %v1766 = vlaneseq
        %v1767 = vshrl.u32 %v1766, 7
        %v1768 = vsub.s32 0, %v1767
        %v1769 = vrot.slane %v1737, %v1768
        %v1771 = vmul.f32 %v1763, %v1769
        %v1772 = vmul.f32 %v1764, %v1769
        %v1774 = vlaneseq
        %v1775 = vshrl.u32 %v1774, 7
        %v1776 = vsub.s32 0, %v1775
        %v1777 = vrot.slane %v1738, %v1776
        %v1779 = vadd.f32 %v1771, %v1777
        %v1780 = vadd.f32 %v1772, %v1777
        %v1781 = vld [vmem:[%s9] sm:$0xff]
        %v1782 = vld [vmem:[%s9 + $0x8] sm:$0xff]
        %v1783 = vld [vmem:[%s9 + $0x10] sm:$0xff]
        %v1784 = vld [vmem:[%s9 + $0x18] sm:$0xff]
        %v1785 = vld [vmem:[%s10] sm:$0x1]
        %v1787 = vlaneseq
        %v1788 = vshrl.u32 %v1787, 7
        %v1789 = vsub.s32 0, %v1788
        %v1790 = vrot.slane %v1785, %v1789
        %v1793 = vsel %vm467, %v1779, 0
        %v1796 = vsel %vm467, %v1780, 0
        %1798 = vmatprep.subr.mxu0 0.0
        %1799 = vmatpush1.msra.mxu0 %v1781
        %1800 = vmatprep.subr.mxu0 0.0
        %1801 = vmatpush1.msra.mxu0 %v1782
        %1802 = vmatprep.subr.mxu0 0.0
        %1803 = vmatpush1.msra.mxu0 %v1783
        %1804 = vmatprep.subr.mxu0 0.0
        %1805 = vmatpush1.msra.mxu0 %v1784
        %1806 = vmatprep.subr.mxu0 0.0
        %1807 = vmatpush1.msra.mxu0 0.0
        %1808 = vmatprep.subr.mxu0 0.0
        %1809 = vmatpush1.msra.mxu0 0.0
        %1810 = vmatprep.subr.mxu0 0.0
        %1811 = vmatpush1.msra.mxu0 0.0
        %1812 = vmatprep.subr.mxu0 0.0
        %1813 = vmatpush1.msra.mxu0 0.0
        %1814 = vmatprep.subr.mxu0 0.0
        %1815 = vmatpush1.msra.mxu0 0.0
        %1816 = vmatprep.subr.mxu0 0.0
        %1817 = vmatpush1.msra.mxu0 0.0
        %1818 = vmatprep.subr.mxu0 0.0
        %1819 = vmatpush1.msra.mxu0 0.0
        %1820 = vmatprep.subr.mxu0 0.0
        %1821 = vmatpush1.msra.mxu0 0.0
        %1822 = vmatprep.subr.mxu0 0.0
        %1823 = vmatpush1.msra.mxu0 0.0
        %1824 = vmatprep.subr.mxu0 0.0
        %1825 = vmatpush1.msra.mxu0 0.0
        %1826 = vmatprep.subr.mxu0 0.0
        %1827 = vmatpush1.msra.mxu0 0.0
        %1828 = vmatprep.subr.mxu0 0.0
        %1829 = vmatpush1.msra.mxu0 0.0
        %1830 = vmatprep.subr.mxu0 0.0
        %1831 = vmatpush1.msra.mxu0 0.0
        %1832 = vmatprep.subr.mxu0 0.0
        %1833 = vmatpush1.msra.mxu0 0.0
        %1834 = vmatprep.subr.mxu0 0.0
        %1835 = vmatpush1.msra.mxu0 0.0
        %1836 = vmatprep.subr.mxu0 0.0
        %1837 = vmatpush1.msra.mxu0 0.0
        %1838 = vmatprep.subr.mxu0 0.0
        %1839 = vmatpush1.msra.mxu0 0.0
        %1840 = vmatprep.subr.mxu0 0.0
        %1841 = vmatpush1.msra.mxu0 0.0
        %1842 = vmatprep.subr.mxu0 0.0
        %1843 = vmatpush1.msra.mxu0 0.0
        %1844 = vmatprep.subr.mxu0 0.0
        %1845 = vmatpush1.msra.mxu0 0.0
        %1846 = vmatprep.subr.mxu0 0.0
        %1847 = vmatpush1.msra.mxu0 0.0
        %1848 = vmatprep.subr.mxu0 0.0
        %1849 = vmatpush1.msra.mxu0 0.0
        %1850 = vmatprep.subr.mxu0 0.0
        %1851 = vmatpush1.msra.mxu0 0.0
        %1852 = vmatprep.subr.mxu0 0.0
        %1853 = vmatpush1.msra.mxu0 0.0
        %1854 = vmatprep.subr.mxu0 0.0
        %1855 = vmatpush1.msra.mxu0 0.0
        %1856 = vmatprep.subr.mxu0 0.0
        %1857 = vmatpush1.msra.mxu0 0.0
        %1858 = vmatprep.subr.mxu0 0.0
        %1859 = vmatpush1.msra.mxu0 0.0
        %1860 = vmatprep.subr.mxu0 0.0
        %1861 = vmatpush1.msra.mxu0 0.0
        %1862 = vmatprep.mubr.f32.mxu0 0.0
        %1863 = vmatmul.mubr.f32.gmra.mrb[0].mxu0 %v1793
        %v1864 = vpop.f32.mrb[0].mxu0
        %v1865 = vadd.f32 %v1790, %v1864
        %v1866 = vpop.f32.mrb[0].mxu0
        %1867 = vmatprep.mubr.f32.mxu0 0.0
        %1868 = vmatmul.mubr.f32.gmra.mrb[0].mxu0 %v1796
        %v1869 = vpop.f32.mrb[0].mxu0
        %v1870 = vadd.f32 %v1790, %v1869
        %v1871 = vpop.f32.mrb[0].mxu0
        %1872 = vdwg.mxu0
        %v1873 = vmul.f32 %v1865, 0.5
        %v1874 = vmul.f32 %v1870, 0.5
        %v1875 = vmul.f32 %v1865, %v1865
        %v1876 = vmul.f32 %v1870, %v1870
        %v1877 = vmul.f32 %v1875, %v1865
        %v1878 = vmul.f32 %v1876, %v1870
        %v1879 = vmul.f32 %v1877, 0.044715
        %v1880 = vmul.f32 %v1878, 0.044715
        %v1881 = vadd.f32 %v1865, %v1879
        %v1882 = vadd.f32 %v1870, %v1880
        %v1883 = vmul.f32 %v1881, 0.7978846
        %v1884 = vmul.f32 %v1882, 0.7978846
        %v1885 = vtanh.pop %v1883
        %v1886 = vtanh.pop %v1884
        %v1887 = vadd.f32 %v1885, 1.0
        %v1888 = vadd.f32 %v1886, 1.0
        %v1889 = vmul.f32 %v1873, %v1887
        %v1890 = vmul.f32 %v1874, %v1888
        %v1891 = vld [vmem:[%s11] sm:$0xff]
        %v1892 = vld [vmem:[%s11 + $0x8] sm:$0xff]
        %v1893 = vld [vmem:[%s11 + $0x10] sm:$0xff]
        %v1894 = vld [vmem:[%s11 + $0x18] sm:$0xff]
        %v1895 = vld [vmem:[%s11 + $0x20] sm:$0xff]
        %v1896 = vld [vmem:[%s11 + $0x28] sm:$0xff]
        %v1897 = vld [vmem:[%s11 + $0x30] sm:$0xff]
        %v1898 = vld [vmem:[%s11 + $0x38] sm:$0xff]
        %v1899 = vld [vmem:[%s11 + $0x40] sm:$0xff]
        %v1900 = vld [vmem:[%s11 + $0x48] sm:$0xff]
        %v1901 = vld [vmem:[%s11 + $0x50] sm:$0xff]
        %v1902 = vld [vmem:[%s11 + $0x58] sm:$0xff]
        %v1903 = vld [vmem:[%s11 + $0x60] sm:$0xff]
        %v1904 = vld [vmem:[%s11 + $0x68] sm:$0xff]
        %v1905 = vld [vmem:[%s11 + $0x70] sm:$0xff]
        %v1906 = vld [vmem:[%s11 + $0x78] sm:$0xff]
        %v1907 = vld [vmem:[%s12] sm:$0x1]
        %v1909 = vlaneseq
        %v1910 = vshrl.u32 %v1909, 7
        %v1911 = vsub.s32 0, %v1910
        %v1912 = vrot.slane %v1907, %v1911
        %1914 = vmatprep.subr.mxu0 0.0
        %1915 = vmatpush1.msra.mxu0 %v1891
        %1916 = vmatprep.subr.mxu0 0.0
        %1917 = vmatpush1.msra.mxu0 %v1892
        %1918 = vmatprep.subr.mxu0 0.0
        %1919 = vmatpush1.msra.mxu0 %v1893
        %1920 = vmatprep.subr.mxu0 0.0
        %1921 = vmatpush1.msra.mxu0 %v1894
        %1922 = vmatprep.subr.mxu0 0.0
        %1923 = vmatpush1.msra.mxu0 %v1895
        %1924 = vmatprep.subr.mxu0 0.0
        %1925 = vmatpush1.msra.mxu0 %v1896
        %1926 = vmatprep.subr.mxu0 0.0
        %1927 = vmatpush1.msra.mxu0 %v1897
        %1928 = vmatprep.subr.mxu0 0.0
        %1929 = vmatpush1.msra.mxu0 %v1898
        %1930 = vmatprep.subr.mxu0 0.0
        %1931 = vmatpush1.msra.mxu0 %v1899
        %1932 = vmatprep.subr.mxu0 0.0
        %1933 = vmatpush1.msra.mxu0 %v1900
        %1934 = vmatprep.subr.mxu0 0.0
        %1935 = vmatpush1.msra.mxu0 %v1901
        %1936 = vmatprep.subr.mxu0 0.0
        %1937 = vmatpush1.msra.mxu0 %v1902
        %1938 = vmatprep.subr.mxu0 0.0
        %1939 = vmatpush1.msra.mxu0 %v1903
        %1940 = vmatprep.subr.mxu0 0.0
        %1941 = vmatpush1.msra.mxu0 %v1904
        %1942 = vmatprep.subr.mxu0 0.0
        %1943 = vmatpush1.msra.mxu0 %v1905
        %1944 = vmatprep.subr.mxu0 0.0
        %1945 = vmatpush1.msra.mxu0 %v1906
        %1946 = vmatprep.subr.mxu0 0.0
        %1947 = vmatpush1.msra.mxu0 0.0
        %1948 = vmatprep.subr.mxu0 0.0
        %1949 = vmatpush1.msra.mxu0 0.0
        %1950 = vmatprep.subr.mxu0 0.0
        %1951 = vmatpush1.msra.mxu0 0.0
        %1952 = vmatprep.subr.mxu0 0.0
        %1953 = vmatpush1.msra.mxu0 0.0
        %1954 = vmatprep.subr.mxu0 0.0
        %1955 = vmatpush1.msra.mxu0 0.0
        %1956 = vmatprep.subr.mxu0 0.0
        %1957 = vmatpush1.msra.mxu0 0.0
        %1958 = vmatprep.subr.mxu0 0.0
        %1959 = vmatpush1.msra.mxu0 0.0
        %1960 = vmatprep.subr.mxu0 0.0
        %1961 = vmatpush1.msra.mxu0 0.0
        %1962 = vmatprep.subr.mxu0 0.0
        %1963 = vmatpush1.msra.mxu0 0.0
        %1964 = vmatprep.subr.mxu0 0.0
        %1965 = vmatpush1.msra.mxu0 0.0
        %1966 = vmatprep.subr.mxu0 0.0
        %1967 = vmatpush1.msra.mxu0 0.0
        %1968 = vmatprep.subr.mxu0 0.0
        %1969 = vmatpush1.msra.mxu0 0.0
        %1970 = vmatprep.subr.mxu0 0.0
        %1971 = vmatpush1.msra.mxu0 0.0
        %1972 = vmatprep.subr.mxu0 0.0
        %1973 = vmatpush1.msra.mxu0 0.0
        %1974 = vmatprep.subr.mxu0 0.0
        %1975 = vmatpush1.msra.mxu0 0.0
        %1976 = vmatprep.subr.mxu0 0.0
        %1977 = vmatpush1.msra.mxu0 0.0
        %1978 = vmatprep.mubr.f32.mxu0 0.0
        %1979 = vmatmul.mubr.f32.gmra.mrb[0].mxu0 %v1889
        %v1980 = vpop.f32.mrb[0].mxu0
        %v1981 = vadd.f32 %v1912, %v1980
        %v1982 = vpop.f32.mrb[0].mxu0
        %1983 = vmatprep.mubr.f32.mxu0 0.0
        %1984 = vmatmul.mubr.f32.gmra.mrb[0].mxu0 %v1890
        %v1985 = vpop.f32.mrb[0].mxu0
        %v1986 = vadd.f32 %v1912, %v1985
        %v1987 = vpop.f32.mrb[0].mxu0
        %1988 = vdwg.mxu0
        %v1989 = vadd.f32 %v1735, %v1981
        %v1990 = vadd.f32 %v1736, %v1986
        %1991 = vst.msk [vmem:[%s448] sm:$0xff] %vm467, %v1989
        %1992 = vst.msk [vmem:[%s448 + $0x8] sm:$0xff] %vm467, %v1990
        %s1993 = sand.u32 %s318, 1
        %s1994 = scalar_lea.sflag [#allocation3], %s1993
        %s1995 = sand.u32 %s318, 1
        %s1996 = smul.addr %s1995, 16
        %s1997 = scalar_lea.vmem [#allocation2], %s1996
        // Predicated region
        $region73: #{tpu_custom_call.1} parent=71 // pred_check
          %p1998 = pneg %p328
        $region74: #{tpu_custom_call.1} parent=71 // pred_check_branch
          %2000 = sbr.rel (%p1998) target = $region76
        $region75: #{tpu_custom_call.1} parent=71 // pred_region
          %s2002 = ssub.s32 256, 256
          %2003 = vsyncadd %s1994, %s2002
          %s2004 = smul.addr %s27, 2
          %s2005 = smul.addr %s2004, 128
          %s2006 = scalar_lea.hbm %s13, %s2005
          %s2007 = sshll.u32 %s1997, 4
          %s2008 = int_to_ptr.vmem [resolvable:$true] %s2007
          %2013 = dma.vmem_to_hbm [thread:$0]  %s2008, 256, %s2006, %s1994, 128, 128, 8
        $region76: #{tpu_custom_call.1} parent=71 // pred_fallthru
          _
      $region72: #{tpu_custom_call.1} parent=5 // pred_fallthru
        _
      %p2014 = scmp.le.s32.totalorder 2, %s22
      // Predicated region
      $region77: #{tpu_custom_call.1} parent=5 // pred_check
        %p2015 = pneg %p2014
      $region78: #{tpu_custom_call.1} parent=5 // pred_check_branch
        %2017 = sbr.rel (%p2015) target = $region80
      $region79: #{tpu_custom_call.1} parent=5 // pred_region
        %s2018 = ssub.s32 %s22, 2
        // Predicated region
        $region81: #{tpu_custom_call.1} parent=79 // pred_check
          %p2019 = pneg %p334
        $region82: #{tpu_custom_call.1} parent=79 // pred_check_branch
          %2021 = sbr.rel (%p2019) target = $region84
        $region83: #{tpu_custom_call.1} parent=79 // pred_region
          %s2022 = sand.u32 %s319, 1
          %s2023 = scalar_lea.sflag [#allocation3], %s2022
          %s2024 = sand.u32 %s319, 1
          %s2025 = smul.addr %s2024, 16
          %s2026 = scalar_lea.vmem [#allocation2], %s2025
          %2027 = dma.done %s2023, 256
        $region84: #{tpu_custom_call.1} parent=79 // pred_fallthru
          _
      $region80: #{tpu_custom_call.1} parent=5 // pred_fallthru
        _
    $region6: #{tpu_custom_call.1} parent=1 // loop_footer
      %s26 = sadd.s32 1, %s22
    $region7: #{tpu_custom_call.1} parent=1 // loop_footer_branch
      %21 = sbr.rel target = $region3
    $region8: #{tpu_custom_call.1} parent=1 // loop_exit
      _
    %2028 = vsyncpa [#allocation3], 1
    %s2029 = scalar_lea.sflag [#allocation3], 1
    %2030 = vsyncpa %s2029, 1

</llo_original>
